<compile_context>
chip_gen: v6e
topology: v6e:2x2x1
jax: 0.10.0
libtpu: 0.0.40
codegen_flags: <defaults>
</compile_context>

<pallas_src>
import functools

import jax
import jax.numpy as jnp
from jax.experimental import pallas as pl
from jax.experimental.pallas import tpu as pltpu

EPS = 1e-5  # torch LayerNorm default eps


def _layernorm(h, gamma, beta):
    mu = jnp.mean(h, axis=-1, keepdims=True)
    var = jnp.mean((h - mu) ** 2, axis=-1, keepdims=True)
    return (h - mu) * jax.lax.rsqrt(var + EPS) * gamma + beta


def _mxu_dot(a, b, dtype):
    # Cast operands to the MXU dtype (bf16 on v5e/v6e/v7x), accumulate in f32.
    return jnp.dot(a.astype(dtype), b.astype(dtype),
                   preferred_element_type=jnp.float32)


def _lightconv1d_kernel(x_ref, w1_ref, b1_ref, g1_ref, be1_ref, alpha_ref,
                        cw_ref, cb_ref, g2_ref, be2_ref, w2_ref, b2_ref,
                        g3_ref, be3_ref, o_ref, carry_ref, *,
                        kernel_size, dilation, block_t, use_im2col,
                        matmul_dtype):
    t_idx = pl.program_id(1)
    p = (kernel_size - 1) * dilation          # causal left-pad length
    TT = block_t

    x = x_ref[0]                              # (TT, Cin) current time tile

    # ---- prologue: Tanh -> Linear(Cin, Cc) -> LayerNorm -> PReLU -----------
    h = jnp.tanh(x)
    h = _mxu_dot(h, w1_ref[...], matmul_dtype) + b1_ref[...]
    h = _layernorm(h, g1_ref[...], be1_ref[...])
    alpha = alpha_ref[0]                      # scalar PReLU weight from SMEM
    h = jnp.where(h >= 0, h, alpha * h)       # (TT, Cc), f32

    if p > 0:
        # Causal halo carried across time tiles (time axis is "arbitrary").
        # At t==0 the carry is zero, which is exactly ConstantPad1d([p,0], 0)
        # applied to the conv input h (i.e. *after* the prologue).
        @pl.when(t_idx == 0)
        def _():
            carry_ref[...] = jnp.zeros_like(carry_ref)

        hh = jnp.concatenate([carry_ref[...], h], axis=0)   # (p + TT, Cc)
        # Last p rows of the running h stream feed the next time tile
        # (handles both TT >= p and TT < p uniformly).
        carry_ref[...] = hh[TT:, :]
    else:
        hh = h

    # ---- causal dilated Conv1d (groups=1) -----------------------------------
    # out[t] = sum_k hh[t + k*d] @ W_k  with W_k = torch_weight[:, :, k].T and
    # hh already left-extended by the carried halo rows (length p = (K-1)*d).
    if use_im2col:
        # Fuse the K taps into one MXU pass: (TT, K*Cc) @ (K*Cc, Cc).
        slab = jnp.concatenate(
            [hh[k * dilation:k * dilation + TT, :] for k in range(kernel_size)],
            axis=-1)
        hc = _mxu_dot(slab, cw_ref[...], matmul_dtype) + cb_ref[...]
    else:
        acc = jnp.zeros((TT, cw_ref.shape[2]), jnp.float32)
        for k in range(kernel_size):          # static, short unrolled loop
            acc = acc + _mxu_dot(hh[k * dilation:k * dilation + TT, :],
                                 cw_ref[k], matmul_dtype)
        hc = acc + cb_ref[...]

    # ---- LayerNorm -> Tanh -> Linear(Cc, Cin) -------------------------------
    hc = _layernorm(hc, g2_ref[...], be2_ref[...])
    hc = jnp.tanh(hc)
    hc = _mxu_dot(hc, w2_ref[...], matmul_dtype) + b2_ref[...]

    # ---- residual add + final LayerNorm(Cin), all in f32 --------------------
    y = x + hc
    o_ref[0] = _layernorm(y, g3_ref[...], be3_ref[...])


def light_conv1d(x, params, *, kernel_size, dilation, block_t=None,
                 matmul_dtype=jnp.bfloat16):
    """x: (B, T, Cin) float32.  params: dict of kernel-ready arrays.

    params["cw"] is the torch Conv1d weight transposed to (K, Cc_in, Cc_out).
    """
    B, T, Cin = x.shape
    Cc = params["w1"].shape[1]
    K = kernel_size
    p = (K - 1) * dilation

    if block_t is None:
        # Default time tile: the biggest tile that keeps VMEM comfortable and
        # gives every matmul a healthy MXU M dimension.
        if T <= 512:
            block_t = T
        else:
            block_t = T
            for cand in (512, 256, 128, 64, 32, 16, 8):
                if T % cand == 0:
                    block_t = cand
                    break
    assert T % block_t == 0, "T must be a multiple of block_t"
    assert block_t == T or block_t % 8 == 0, \
        "time tile must be a multiple of 8 (sublane tiling) or the full T"
    nt = T // block_t

    use_im2col = Cc < 128
    cw = params["cw"]                          # (K, Cc_in, Cc_out)
    if use_im2col:
        cw = cw.reshape(K * Cc, Cc)            # fused-tap weight for im2col dot

    cm2 = lambda b, t: (0, 0)
    cm3 = lambda b, t: (0, 0, 0)
    vec = lambda c: pl.BlockSpec((1, c), cm2)

    x_spec = pl.BlockSpec((1, block_t, Cin), lambda b, t: (b, t, 0))

    if use_im2col:
        cw_spec = pl.BlockSpec((K * Cc, Cc), cm2)
    else:
        cw_spec = pl.BlockSpec((K, Cc, Cc), cm3)

    in_specs = [
        x_spec,                                             # x (current tile)
        pl.BlockSpec((Cin, Cc), cm2),                       # w1
        vec(Cc), vec(Cc), vec(Cc),                          # b1, ln1 g, ln1 b
        pl.BlockSpec(memory_space=pltpu.MemorySpace.SMEM),  # PReLU alpha (SMEM)
        cw_spec,                                            # conv weight
        vec(Cc), vec(Cc), vec(Cc),                          # cb, ln2 g, ln2 b
        pl.BlockSpec((Cc, Cin), cm2),                       # w2
        vec(Cin), vec(Cin), vec(Cin),                       # b2, ln3 g, ln3 b
    ]

    kernel = functools.partial(
        _lightconv1d_kernel, kernel_size=K, dilation=dilation,
        block_t=block_t, use_im2col=use_im2col, matmul_dtype=matmul_dtype)

    return pl.pallas_call(
        kernel,
        out_shape=jax.ShapeDtypeStruct((B, T, Cin), jnp.float32),
        grid_spec=pltpu.PrefetchScalarGridSpec(
            num_scalar_prefetch=0,
            grid=(B, nt),
            in_specs=in_specs,
            out_specs=pl.BlockSpec((1, block_t, Cin), lambda b, t: (b, t, 0)),
            # Carried causal halo: last p rows of h from the previous tile.
            scratch_shapes=[pltpu.VMEM((max(p, 1), Cc), jnp.float32)],
        ),
        compiler_params=pltpu.CompilerParams(
            # Batch rows are independent -> "parallel" (megacore sharding);
            # the time axis carries the causal halo -> "arbitrary".
            dimension_semantics=("parallel", "arbitrary"),
            # Explicit scoped-VMEM limit: ~75% of v7x's 64 MiB physical VMEM
            # (harmless headroom on v5e/v6e which have 128 MiB).
            vmem_limit_bytes=48 * 1024 * 1024,
        ),
    )(x, params["w1"], params["b1"], params["g1"], params["be1"],
      params["alpha"], cw, params["cb"], params["g2"], params["be2"],
      params["w2"], params["b2"], params["g3"], params["be3"])


def _reference(x, params, *, kernel_size, dilation, matmul_dtype=jnp.float32):
    """Pure-JAX reference of the torch forward pass (channels-last layout)."""
    def ln(h, g, b):
        mu = jnp.mean(h, -1, keepdims=True)
        var = jnp.mean((h - mu) ** 2, -1, keepdims=True)
        return (h - mu) * jax.lax.rsqrt(var + EPS) * g + b

    def dot(a, b):
        return jnp.dot(a.astype(matmul_dtype), b.astype(matmul_dtype),
                       preferred_element_type=jnp.float32)

    h = jnp.tanh(x)
    h = dot(h, params["w1"]) + params["b1"]
    h = ln(h, params["g1"], params["be1"])
    a = params["alpha"][0]
    h = jnp.where(h >= 0, h, a * h)
    p = (kernel_size - 1) * dilation
    hp = jnp.pad(h, ((0, 0), (p, 0), (0, 0)))
    T = x.shape[1]
    acc = jnp.zeros((x.shape[0], T, params["cw"].shape[2]), jnp.float32)
    for k in range(kernel_size):
        acc = acc + dot(hp[:, k * dilation:k * dilation + T, :],
                        params["cw"][k])
    h = acc + params["cb"]
    h = ln(h, params["g2"], params["be2"])
    h = jnp.tanh(h)
    h = dot(h, params["w2"]) + params["b2"]
    y = x + h
    return ln(y, params["g3"], params["be3"])


if __name__ == "__main__":
    B, T, Cin, Cc = 2, 512, 8, 16
    K, DIL = 3, 2
    TT = 128                      # 4 time tiles per batch row -> grid (2, 4)

    key = jax.random.PRNGKey(0)
    keys = jax.random.split(key, 8)

    # Deterministic synthetic parameters (shapes follow the torch module):
    #   Linear(in, Cc):  torch weight (Cc, Cin) -> stored transposed (Cin, Cc)
    #   Conv1d(Cc, Cc, K, groups=1): torch weight (Cc_out, Cc_in, K)
    #       -> stored as (K, Cc_in, Cc_out) so the kernel does h_slice @ cw[k]
    #   Linear(Cc, in):  torch weight (Cin, Cc) -> stored transposed (Cc, Cin)
    w1_t = 0.1 * jax.random.normal(keys[0], (Cc, Cin), jnp.float32)
    b1 = 0.01 * jax.random.normal(keys[1], (Cc,), jnp.float32)
    conv_w_t = 0.1 * jax.random.normal(keys[2], (Cc, Cc, K), jnp.float32)
    conv_b = 0.01 * jax.random.normal(keys[3], (Cc,), jnp.float32)
    w2_t = 0.1 * jax.random.normal(keys[4], (Cin, Cc), jnp.float32)
    b2 = 0.01 * jax.random.normal(keys[5], (Cin,), jnp.float32)

    params = {
        "w1": w1_t.T,                                   # (Cin, Cc)
        "b1": b1.reshape(1, Cc),
        "g1": jnp.ones((1, Cc), jnp.float32),           # LayerNorm init
        "be1": jnp.zeros((1, Cc), jnp.float32),
        "alpha": jnp.full((1,), 0.142, jnp.float32),    # PReLU init (SMEM scalar)
        "cw": jnp.transpose(conv_w_t, (2, 1, 0)),       # (K, Cc_in, Cc_out)
        "cb": conv_b.reshape(1, Cc),
        "g2": jnp.ones((1, Cc), jnp.float32),
        "be2": jnp.zeros((1, Cc), jnp.float32),
        "w2": w2_t.T,                                   # (Cc, Cin)
        "b2": b2.reshape(1, Cin),
        "g3": jnp.ones((1, Cin), jnp.float32),          # final LayerNorm
        "be3": jnp.zeros((1, Cin), jnp.float32),
    }

    x = jax.random.normal(keys[6], (B, T, Cin), jnp.float32)

    # 1) f32 matmul operands: tight parity against the pure-f32 reference.
    out_f32 = light_conv1d(x, params, kernel_size=K, dilation=DIL,
                           block_t=TT, matmul_dtype=jnp.float32)
    out_f32 = jax.block_until_ready(out_f32)
    ref_f32 = _reference(x, params, kernel_size=K, dilation=DIL,
                         matmul_dtype=jnp.float32)
    assert out_f32.shape == (B, T, Cin)
    assert jnp.allclose(out_f32, ref_f32, atol=2e-5, rtol=2e-5)

    # 2) default bf16 matmul operands (perf config for v5e/v6e/v7x): compare
    #    against a reference that rounds the dot operands the same way, plus a
    #    loose check against the pure-f32 reference.
    out_bf16 = light_conv1d(x, params, kernel_size=K, dilation=DIL, block_t=TT)
    out_bf16 = jax.block_until_ready(out_bf16)
    ref_bf16 = _reference(x, params, kernel_size=K, dilation=DIL,
                          matmul_dtype=jnp.bfloat16)
    assert jnp.allclose(out_bf16, ref_bf16, atol=1e-2, rtol=1e-2)
    assert jnp.allclose(out_bf16, ref_f32, atol=1e-1, rtol=1e-1)

    print("KERNEL_OK")
</pallas_src>

<mosaic_0001>
module attributes {stable_mosaic.version = 11 : i64} {
  func.func @_lightconv1d_kernel(%arg0: i32, %arg1: i32, %arg2: memref<1x128x8xf32, #tpu.memory_space<vmem>>, %arg3: memref<8x16xf32, #tpu.memory_space<vmem>>, %arg4: memref<1x16xf32, #tpu.memory_space<vmem>>, %arg5: memref<1x16xf32, #tpu.memory_space<vmem>>, %arg6: memref<1x16xf32, #tpu.memory_space<vmem>>, %arg7: memref<1xf32, #tpu.memory_space<smem>>, %arg8: memref<48x16xf32, #tpu.memory_space<vmem>>, %arg9: memref<1x16xf32, #tpu.memory_space<vmem>>, %arg10: memref<1x16xf32, #tpu.memory_space<vmem>>, %arg11: memref<1x16xf32, #tpu.memory_space<vmem>>, %arg12: memref<16x8xf32, #tpu.memory_space<vmem>>, %arg13: memref<1x8xf32, #tpu.memory_space<vmem>>, %arg14: memref<1x8xf32, #tpu.memory_space<vmem>>, %arg15: memref<1x8xf32, #tpu.memory_space<vmem>>, %arg16: memref<1x128x8xf32, #tpu.memory_space<vmem>>, %arg17: memref<4x16xf32, #tpu.memory_space<vmem>>) attributes {dimension_semantics = [#tpu.dimension_semantics<parallel>, #tpu.dimension_semantics<arbitrary>], iteration_bounds = array<i64: 2, 4>, scalar_prefetch = 0 : i64, scratch_operands = 1 : i64, tpu.core_type = #tpu.core_type<tc>, window_params = [{transform_indices = @transform_0, window_bounds = array<i64: 1, 128, 8>}, {pipeline_mode = #tpu.pipeline_mode<synchronous>, transform_indices = @transform_1, window_bounds = array<i64: 8, 16>}, {pipeline_mode = #tpu.pipeline_mode<synchronous>, transform_indices = @transform_2, window_bounds = array<i64: 1, 16>}, {pipeline_mode = #tpu.pipeline_mode<synchronous>, transform_indices = @transform_3, window_bounds = array<i64: 1, 16>}, {pipeline_mode = #tpu.pipeline_mode<synchronous>, transform_indices = @transform_4, window_bounds = array<i64: 1, 16>}, {transform_indices = @transform_5, window_bounds = array<i64: 1>}, {pipeline_mode = #tpu.pipeline_mode<synchronous>, transform_indices = @transform_6, window_bounds = array<i64: 48, 16>}, {pipeline_mode = #tpu.pipeline_mode<synchronous>, transform_indices = @transform_7, window_bounds = array<i64: 1, 16>}, {pipeline_mode = #tpu.pipeline_mode<synchronous>, transform_indices = @transform_8, window_bounds = array<i64: 1, 16>}, {pipeline_mode = #tpu.pipeline_mode<synchronous>, transform_indices = @transform_9, window_bounds = array<i64: 1, 16>}, {pipeline_mode = #tpu.pipeline_mode<synchronous>, transform_indices = @transform_10, window_bounds = array<i64: 16, 8>}, {pipeline_mode = #tpu.pipeline_mode<synchronous>, transform_indices = @transform_11, window_bounds = array<i64: 1, 8>}, {pipeline_mode = #tpu.pipeline_mode<synchronous>, transform_indices = @transform_12, window_bounds = array<i64: 1, 8>}, {pipeline_mode = #tpu.pipeline_mode<synchronous>, transform_indices = @transform_13, window_bounds = array<i64: 1, 8>}, {transform_indices = @transform_14, window_bounds = array<i64: 1, 128, 8>}]} {
    %c0 = arith.constant 0 : index
    %c0_0 = arith.constant 0 : index
    %c0_1 = arith.constant 0 : index
    %0 = vector.load %arg2[%c0, %c0_0, %c0_1] : memref<1x128x8xf32, #tpu.memory_space<vmem>>, vector<1x128x8xf32>
    %1 = vector.shape_cast %0 : vector<1x128x8xf32> to vector<128x8xf32>
    %2 = math.tanh %1 : vector<128x8xf32>
    %c0_2 = arith.constant 0 : index
    %c0_3 = arith.constant 0 : index
    %3 = vector.load %arg3[%c0_2, %c0_3] : memref<8x16xf32, #tpu.memory_space<vmem>>, vector<8x16xf32>
    %cst = arith.constant dense<0.000000e+00> : vector<128x16xf32>
    %4 = tpu.matmul %2, %3, %cst {dimension_numbers = #tpu.dot_dimension_numbers<[1], [0], [0], [1], [0, 0, 1, 1], [], []>} : vector<128x8xf32>, vector<8x16xf32>, vector<128x16xf32> -> vector<128x16xf32>
    %c0_4 = arith.constant 0 : index
    %c0_5 = arith.constant 0 : index
    %5 = vector.load %arg4[%c0_4, %c0_5] : memref<1x16xf32, #tpu.memory_space<vmem>>, vector<1x16xf32>
    %6 = vector.broadcast %5 : vector<1x16xf32> to vector<128x16xf32>
    %7 = arith.addf %4, %6 : vector<128x16xf32>
    %c0_6 = arith.constant 0 : index
    %c0_7 = arith.constant 0 : index
    %8 = vector.load %arg5[%c0_6, %c0_7] : memref<1x16xf32, #tpu.memory_space<vmem>>, vector<1x16xf32>
    %c0_8 = arith.constant 0 : index
    %c0_9 = arith.constant 0 : index
    %9 = vector.load %arg6[%c0_8, %c0_9] : memref<1x16xf32, #tpu.memory_space<vmem>>, vector<1x16xf32>
    %cst_10 = arith.constant dense<0.000000e+00> : vector<128xf32>
    %10 = vector.multi_reduction <add>, %7, %cst_10 [1] : vector<128x16xf32> to vector<128xf32>
    %11 = vector.shape_cast %10 : vector<128xf32> to vector<128x1xf32>
    %cst_11 = arith.constant 1.600000e+01 : f32
    %12 = vector.broadcast %cst_11 : f32 to vector<128x1xf32>
    %13 = arith.divf %11, %12 : vector<128x1xf32>
    %14 = vector.broadcast %13 : vector<128x1xf32> to vector<128x16xf32>
    %15 = arith.subf %7, %14 : vector<128x16xf32>
    %16 = arith.mulf %15, %15 : vector<128x16xf32>
    %cst_12 = arith.constant dense<0.000000e+00> : vector<128xf32>
    %17 = vector.multi_reduction <add>, %16, %cst_12 [1] : vector<128x16xf32> to vector<128xf32>
    %18 = vector.shape_cast %17 : vector<128xf32> to vector<128x1xf32>
    %cst_13 = arith.constant 1.600000e+01 : f32
    %19 = vector.broadcast %cst_13 : f32 to vector<128x1xf32>
    %20 = arith.divf %18, %19 : vector<128x1xf32>
    %21 = vector.broadcast %13 : vector<128x1xf32> to vector<128x16xf32>
    %22 = arith.subf %7, %21 : vector<128x16xf32>
    %cst_14 = arith.constant 9.99999974E-6 : f32
    %23 = vector.broadcast %cst_14 : f32 to vector<128x1xf32>
    %24 = arith.addf %20, %23 : vector<128x1xf32>
    %25 = math.rsqrt %24 : vector<128x1xf32>
    %26 = vector.broadcast %25 : vector<128x1xf32> to vector<128x16xf32>
    %27 = arith.mulf %22, %26 : vector<128x16xf32>
    %28 = vector.broadcast %8 : vector<1x16xf32> to vector<128x16xf32>
    %29 = arith.mulf %27, %28 : vector<128x16xf32>
    %30 = vector.broadcast %9 : vector<1x16xf32> to vector<128x16xf32>
    %31 = arith.addf %29, %30 : vector<128x16xf32>
    %c0_15 = arith.constant 0 : index
    %32 = memref.load %arg7[%c0_15] : memref<1xf32, #tpu.memory_space<smem>>
    %cst_16 = arith.constant 0.000000e+00 : f32
    %33 = vector.broadcast %cst_16 : f32 to vector<128x16xf32>
    %34 = arith.cmpf oge, %31, %33 : vector<128x16xf32>
    %35 = vector.broadcast %32 : f32 to vector<128x16xf32>
    %36 = arith.mulf %35, %31 : vector<128x16xf32>
    %37 = arith.select %34, %31, %36 : vector<128x16xi1>, vector<128x16xf32>
    %c0_i32 = arith.constant 0 : i32
    %38 = arith.cmpi eq, %arg1, %c0_i32 : i32
    %39 = arith.extui %38 : i1 to i32
    %c0_i32_17 = arith.constant 0 : i32
    %40 = arith.cmpi ne, %39, %c0_i32_17 : i32
    scf.if %40 {
      %cst_53 = arith.constant 0.000000e+00 : f32
      %112 = vector.broadcast %cst_53 : f32 to vector<4x16xf32>
      %c0_54 = arith.constant 0 : index
      %c0_55 = arith.constant 0 : index
      %113 = vector.load %arg17[%c0_54, %c0_55] : memref<4x16xf32, #tpu.memory_space<vmem>>, vector<4x16xf32>
      tpu.vector_store %arg17[%c0_54, %c0_55], %112 {strides = array<i32>} : memref<4x16xf32, #tpu.memory_space<vmem>>, vector<4x16xf32>,
    } else {
    }
    %c0_18 = arith.constant 0 : index
    %c0_19 = arith.constant 0 : index
    %41 = vector.load %arg17[%c0_18, %c0_19] : memref<4x16xf32, #tpu.memory_space<vmem>>, vector<4x16xf32>
    %42 = tpu.concatenate %41, %37 in 0 : vector<4x16xf32>, vector<128x16xf32> -> vector<132x16xf32>
    %43 = vector.extract_strided_slice %42 {offsets = [128, 0], sizes = [4, 16], strides = [1, 1]} : vector<132x16xf32> to vector<4x16xf32>
    %c0_20 = arith.constant 0 : index
    %c0_21 = arith.constant 0 : index
    %44 = vector.load %arg17[%c0_20, %c0_21] : memref<4x16xf32, #tpu.memory_space<vmem>>, vector<4x16xf32>
    tpu.vector_store %arg17[%c0_20, %c0_21], %43 {strides = array<i32>} : memref<4x16xf32, #tpu.memory_space<vmem>>, vector<4x16xf32>,
    %45 = vector.extract_strided_slice %42 {offsets = [0, 0], sizes = [128, 16], strides = [1, 1]} : vector<132x16xf32> to vector<128x16xf32>
    %46 = vector.extract_strided_slice %42 {offsets = [2, 0], sizes = [128, 16], strides = [1, 1]} : vector<132x16xf32> to vector<128x16xf32>
    %47 = vector.extract_strided_slice %42 {offsets = [4, 0], sizes = [128, 16], strides = [1, 1]} : vector<132x16xf32> to vector<128x16xf32>
    %48 = tpu.concatenate %45, %46, %47 in 1 : vector<128x16xf32>, vector<128x16xf32>, vector<128x16xf32> -> vector<128x48xf32>
    %c0_22 = arith.constant 0 : index
    %c0_23 = arith.constant 0 : index
    %49 = vector.load %arg8[%c0_22, %c0_23] : memref<48x16xf32, #tpu.memory_space<vmem>>, vector<48x16xf32>
    %cst_24 = arith.constant dense<0.000000e+00> : vector<128x16xf32>
    %50 = tpu.matmul %48, %49, %cst_24 {dimension_numbers = #tpu.dot_dimension_numbers<[1], [0], [0], [1], [0, 0, 1, 1], [], []>} : vector<128x48xf32>, vector<48x16xf32>, vector<128x16xf32> -> vector<128x16xf32>
    %c0_25 = arith.constant 0 : index
    %c0_26 = arith.constant 0 : index
    %51 = vector.load %arg9[%c0_25, %c0_26] : memref<1x16xf32, #tpu.memory_space<vmem>>, vector<1x16xf32>
    %52 = vector.broadcast %51 : vector<1x16xf32> to vector<128x16xf32>
    %53 = arith.addf %50, %52 : vector<128x16xf32>
    %c0_27 = arith.constant 0 : index
    %c0_28 = arith.constant 0 : index
    %54 = vector.load %arg10[%c0_27, %c0_28] : memref<1x16xf32, #tpu.memory_space<vmem>>, vector<1x16xf32>
    %c0_29 = arith.constant 0 : index
    %c0_30 = arith.constant 0 : index
    %55 = vector.load %arg11[%c0_29, %c0_30] : memref<1x16xf32, #tpu.memory_space<vmem>>, vector<1x16xf32>
    %cst_31 = arith.constant dense<0.000000e+00> : vector<128xf32>
    %56 = vector.multi_reduction <add>, %53, %cst_31 [1] : vector<128x16xf32> to vector<128xf32>
    %57 = vector.shape_cast %56 : vector<128xf32> to vector<128x1xf32>
    %cst_32 = arith.constant 1.600000e+01 : f32
    %58 = vector.broadcast %cst_32 : f32 to vector<128x1xf32>
    %59 = arith.divf %57, %58 : vector<128x1xf32>
    %60 = vector.broadcast %59 : vector<128x1xf32> to vector<128x16xf32>
    %61 = arith.subf %53, %60 : vector<128x16xf32>
    %62 = arith.mulf %61, %61 : vector<128x16xf32>
    %cst_33 = arith.constant dense<0.000000e+00> : vector<128xf32>
    %63 = vector.multi_reduction <add>, %62, %cst_33 [1] : vector<128x16xf32> to vector<128xf32>
    %64 = vector.shape_cast %63 : vector<128xf32> to vector<128x1xf32>
    %cst_34 = arith.constant 1.600000e+01 : f32
    %65 = vector.broadcast %cst_34 : f32 to vector<128x1xf32>
    %66 = arith.divf %64, %65 : vector<128x1xf32>
    %67 = vector.broadcast %59 : vector<128x1xf32> to vector<128x16xf32>
    %68 = arith.subf %53, %67 : vector<128x16xf32>
    %cst_35 = arith.constant 9.99999974E-6 : f32
    %69 = vector.broadcast %cst_35 : f32 to vector<128x1xf32>
    %70 = arith.addf %66, %69 : vector<128x1xf32>
    %71 = math.rsqrt %70 : vector<128x1xf32>
    %72 = vector.broadcast %71 : vector<128x1xf32> to vector<128x16xf32>
    %73 = arith.mulf %68, %72 : vector<128x16xf32>
    %74 = vector.broadcast %54 : vector<1x16xf32> to vector<128x16xf32>
    %75 = arith.mulf %73, %74 : vector<128x16xf32>
    %76 = vector.broadcast %55 : vector<1x16xf32> to vector<128x16xf32>
    %77 = arith.addf %75, %76 : vector<128x16xf32>
    %78 = math.tanh %77 : vector<128x16xf32>
    %c0_36 = arith.constant 0 : index
    %c0_37 = arith.constant 0 : index
    %79 = vector.load %arg12[%c0_36, %c0_37] : memref<16x8xf32, #tpu.memory_space<vmem>>, vector<16x8xf32>
    %cst_38 = arith.constant dense<0.000000e+00> : vector<128x8xf32>
    %80 = tpu.matmul %78, %79, %cst_38 {dimension_numbers = #tpu.dot_dimension_numbers<[1], [0], [0], [1], [0, 0, 1, 1], [], []>} : vector<128x16xf32>, vector<16x8xf32>, vector<128x8xf32> -> vector<128x8xf32>
    %c0_39 = arith.constant 0 : index
    %c0_40 = arith.constant 0 : index
    %81 = vector.load %arg13[%c0_39, %c0_40] : memref<1x8xf32, #tpu.memory_space<vmem>>, vector<1x8xf32>
    %82 = vector.broadcast %81 : vector<1x8xf32> to vector<128x8xf32>
    %83 = arith.addf %80, %82 : vector<128x8xf32>
    %84 = arith.addf %1, %83 : vector<128x8xf32>
    %c0_41 = arith.constant 0 : index
    %c0_42 = arith.constant 0 : index
    %85 = vector.load %arg14[%c0_41, %c0_42] : memref<1x8xf32, #tpu.memory_space<vmem>>, vector<1x8xf32>
    %c0_43 = arith.constant 0 : index
    %c0_44 = arith.constant 0 : index
    %86 = vector.load %arg15[%c0_43, %c0_44] : memref<1x8xf32, #tpu.memory_space<vmem>>, vector<1x8xf32>
    %cst_45 = arith.constant dense<0.000000e+00> : vector<128xf32>
    %87 = vector.multi_reduction <add>, %84, %cst_45 [1] : vector<128x8xf32> to vector<128xf32>
    %88 = vector.shape_cast %87 : vector<128xf32> to vector<128x1xf32>
    %cst_46 = arith.constant 8.000000e+00 : f32
    %89 = vector.broadcast %cst_46 : f32 to vector<128x1xf32>
    %90 = arith.divf %88, %89 : vector<128x1xf32>
    %91 = vector.broadcast %90 : vector<128x1xf32> to vector<128x8xf32>
    %92 = arith.subf %84, %91 : vector<128x8xf32>
    %93 = arith.mulf %92, %92 : vector<128x8xf32>
    %cst_47 = arith.constant dense<0.000000e+00> : vector<128xf32>
    %94 = vector.multi_reduction <add>, %93, %cst_47 [1] : vector<128x8xf32> to vector<128xf32>
    %95 = vector.shape_cast %94 : vector<128xf32> to vector<128x1xf32>
    %cst_48 = arith.constant 8.000000e+00 : f32
    %96 = vector.broadcast %cst_48 : f32 to vector<128x1xf32>
    %97 = arith.divf %95, %96 : vector<128x1xf32>
    %98 = vector.broadcast %90 : vector<128x1xf32> to vector<128x8xf32>
    %99 = arith.subf %84, %98 : vector<128x8xf32>
    %cst_49 = arith.constant 9.99999974E-6 : f32
    %100 = vector.broadcast %cst_49 : f32 to vector<128x1xf32>
    %101 = arith.addf %97, %100 : vector<128x1xf32>
    %102 = math.rsqrt %101 : vector<128x1xf32>
    %103 = vector.broadcast %102 : vector<128x1xf32> to vector<128x8xf32>
    %104 = arith.mulf %99, %103 : vector<128x8xf32>
    %105 = vector.broadcast %85 : vector<1x8xf32> to vector<128x8xf32>
    %106 = arith.mulf %104, %105 : vector<128x8xf32>
    %107 = vector.broadcast %86 : vector<1x8xf32> to vector<128x8xf32>
    %108 = arith.addf %106, %107 : vector<128x8xf32>
    %c0_50 = arith.constant 0 : index
    %c0_51 = arith.constant 0 : index
    %c0_52 = arith.constant 0 : index
    %109 = vector.load %arg16[%c0_50, %c0_51, %c0_52] : memref<1x128x8xf32, #tpu.memory_space<vmem>>, vector<1x128x8xf32>
    %110 = vector.shape_cast %109 : vector<1x128x8xf32> to vector<128x8xf32>
    %111 = vector.shape_cast %108 : vector<128x8xf32> to vector<1x128x8xf32>
    tpu.vector_store %arg16[%c0_50, %c0_51, %c0_52], %111 {strides = array<i32>} : memref<1x128x8xf32, #tpu.memory_space<vmem>>, vector<1x128x8xf32>,
    return
  }
  func.func @transform_0(%arg0: i32, %arg1: i32) -> (i32, i32, i32) {
    %c0_i32 = arith.constant 0 : i32
    %c0_i32_0 = arith.constant 0 : i32
    return %arg0, %arg1, %c0_i32 : i32, i32, i32
  }
  func.func @transform_1(%arg0: i32, %arg1: i32) -> (i32, i32) {
    %c0_i32 = arith.constant 0 : i32
    %c0_i32_0 = arith.constant 0 : i32
    %c0_i32_1 = arith.constant 0 : i32
    return %c0_i32, %c0_i32_0 : i32, i32
  }
  func.func @transform_2(%arg0: i32, %arg1: i32) -> (i32, i32) {
    %c0_i32 = arith.constant 0 : i32
    %c0_i32_0 = arith.constant 0 : i32
    %c0_i32_1 = arith.constant 0 : i32
    return %c0_i32, %c0_i32_0 : i32, i32
  }
  func.func @transform_3(%arg0: i32, %arg1: i32) -> (i32, i32) {
    %c0_i32 = arith.constant 0 : i32
    %c0_i32_0 = arith.constant 0 : i32
    %c0_i32_1 = arith.constant 0 : i32
    return %c0_i32, %c0_i32_0 : i32, i32
  }
  func.func @transform_4(%arg0: i32, %arg1: i32) -> (i32, i32) {
    %c0_i32 = arith.constant 0 : i32
    %c0_i32_0 = arith.constant 0 : i32
    %c0_i32_1 = arith.constant 0 : i32
    return %c0_i32, %c0_i32_0 : i32, i32
  }
  func.func @transform_5(%arg0: i32, %arg1: i32) -> i32 {
    %c0_i32 = arith.constant 0 : i32
    %c0_i32_0 = arith.constant 0 : i32
    return %c0_i32 : i32
  }
  func.func @transform_6(%arg0: i32, %arg1: i32) -> (i32, i32) {
    %c0_i32 = arith.constant 0 : i32
    %c0_i32_0 = arith.constant 0 : i32
    %c0_i32_1 = arith.constant 0 : i32
    return %c0_i32, %c0_i32_0 : i32, i32
  }
  func.func @transform_7(%arg0: i32, %arg1: i32) -> (i32, i32) {
    %c0_i32 = arith.constant 0 : i32
    %c0_i32_0 = arith.constant 0 : i32
    %c0_i32_1 = arith.constant 0 : i32
    return %c0_i32, %c0_i32_0 : i32, i32
  }
  func.func @transform_8(%arg0: i32, %arg1: i32) -> (i32, i32) {
    %c0_i32 = arith.constant 0 : i32
    %c0_i32_0 = arith.constant 0 : i32
    %c0_i32_1 = arith.constant 0 : i32
    return %c0_i32, %c0_i32_0 : i32, i32
  }
  func.func @transform_9(%arg0: i32, %arg1: i32) -> (i32, i32) {
    %c0_i32 = arith.constant 0 : i32
    %c0_i32_0 = arith.constant 0 : i32
    %c0_i32_1 = arith.constant 0 : i32
    return %c0_i32, %c0_i32_0 : i32, i32
  }
  func.func @transform_10(%arg0: i32, %arg1: i32) -> (i32, i32) {
    %c0_i32 = arith.constant 0 : i32
    %c0_i32_0 = arith.constant 0 : i32
    %c0_i32_1 = arith.constant 0 : i32
    return %c0_i32, %c0_i32_0 : i32, i32
  }
  func.func @transform_11(%arg0: i32, %arg1: i32) -> (i32, i32) {
    %c0_i32 = arith.constant 0 : i32
    %c0_i32_0 = arith.constant 0 : i32
    %c0_i32_1 = arith.constant 0 : i32
    return %c0_i32, %c0_i32_0 : i32, i32
  }
  func.func @transform_12(%arg0: i32, %arg1: i32) -> (i32, i32) {
    %c0_i32 = arith.constant 0 : i32
    %c0_i32_0 = arith.constant 0 : i32
    %c0_i32_1 = arith.constant 0 : i32
    return %c0_i32, %c0_i32_0 : i32, i32
  }
  func.func @transform_13(%arg0: i32, %arg1: i32) -> (i32, i32) {
    %c0_i32 = arith.constant 0 : i32
    %c0_i32_0 = arith.constant 0 : i32
    %c0_i32_1 = arith.constant 0 : i32
    return %c0_i32, %c0_i32_0 : i32, i32
  }
  func.func @transform_14(%arg0: i32, %arg1: i32) -> (i32, i32, i32) {
    %c0_i32 = arith.constant 0 : i32
    %c0_i32_0 = arith.constant 0 : i32
    return %arg0, %arg1, %c0_i32 : i32, i32, i32
  }
}

</mosaic_0001>

<llo_original>
// kernel: tpu_custom_call.1
$region0: #{tpu_custom_call.1}
  #allocation0 [shape = 'u32[]', space=smem, size = 0x4, offset = 0x4, fixed_abs, tag = 'smem constant byte address 0x4 - core index']
  #allocation1 [shape = 'u32[144,128]{1,0:T(1,128)}', space=vmem, size = 0x12000, scoped, tag = 'internal scratch']
  #allocation2 [shape = 'f32[4,16]{1,0:T(4,128)}', space=vmem, size = 0x800, scoped, tag = 'scratch operand']
  #allocation3 [shape = 'f32[1]{0:T(128)S(6)}', space=smem, size = 0x200, scoped, tag = 'scoped memory for tpu_custom_call.1']
  %s0 = inlined_call_operand.vmem [shape: f32[2,512,8], index: 0, kind: input, shape index: {}]
  %s1 = inlined_call_operand.vmem [shape: f32[8,16], index: 1, kind: input, shape index: {}]
  %s2 = inlined_call_operand.vmem [shape: f32[1,16], index: 2, kind: input, shape index: {}]
  %s3 = inlined_call_operand.vmem [shape: f32[1,16], index: 3, kind: input, shape index: {}]
  %s4 = inlined_call_operand.vmem [shape: f32[1,16], index: 4, kind: input, shape index: {}]
  %s5 = inlined_call_operand.<no memory space> [shape: f32[1], index: 5, kind: input, shape index: {}]
  %s6 = inlined_call_operand.vmem [shape: f32[48,16], index: 6, kind: input, shape index: {}]
  %s7 = inlined_call_operand.vmem [shape: f32[1,16], index: 7, kind: input, shape index: {}]
  %s8 = inlined_call_operand.vmem [shape: f32[1,16], index: 8, kind: input, shape index: {}]
  %s9 = inlined_call_operand.vmem [shape: f32[1,16], index: 9, kind: input, shape index: {}]
  %s10 = inlined_call_operand.vmem [shape: f32[16,8], index: 10, kind: input, shape index: {}]
  %s11 = inlined_call_operand.vmem [shape: f32[1,8], index: 11, kind: input, shape index: {}]
  %s12 = inlined_call_operand.vmem [shape: f32[1,8], index: 12, kind: input, shape index: {}]
  %s13 = inlined_call_operand.vmem [shape: f32[1,8], index: 13, kind: input, shape index: {}]
  %s14 = inlined_call_operand.vmem [shape: f32[2,512,8], index: 14, kind: output, shape index: {}]
  %s15 = sld [smem:[#allocation0]]
  $region93: #{tpu_custom_call.1} parent=0
    _
  %s17 = ssub.s32 1, %s15
  %s18 = scalar_select 0, %s17, %s15
  %19 = sst [smem:[#allocation3]] %s5
  loop: start=0, step=1, limit=10
  $region2: #{tpu_custom_call.1} parent=0 // loop_pre_header
    _
  $region3: #{tpu_custom_call.1} parent=0 // loop_header
    %s21 = sphi 0, %s25
    %p22 = scmp.ge.s32.totalorder %s21, 10
    %s28 = sphi 0, %s40
    %s29 = sphi 0, %s36
    %s30 = sphi 0, %s28
    %s31 = sphi 0, %s29
    %s32 = sphi 0, %s30
    %s33 = sphi 0, %s31
    %s45 = sphi 0, %s47
    %s48 = sphi 0, %s45
    %s49 = sphi 0, %s48
    %s65 = sphi 0, %s49
    %s69 = sphi 0, %s69
    %s71 = sphi 0, %s69
    %s72 = sphi 0, %s71
    %s86 = sphi 0, %s72
    %s90 = sphi 0, %s90
    %s92 = sphi 0, %s90
    %s93 = sphi 0, %s92
    %s107 = sphi 0, %s93
    %s111 = sphi 0, %s111
    %s113 = sphi 0, %s111
    %s114 = sphi 0, %s113
    %s128 = sphi 0, %s114
    %s132 = sphi 0, %s132
    %s134 = sphi 0, %s132
    %s135 = sphi 0, %s134
    %s149 = sphi 0, %s135
    %s153 = sphi 0, %s153
    %s155 = sphi 0, %s153
    %s156 = sphi 0, %s155
    %s170 = sphi 0, %s156
    %s174 = sphi 0, %s174
    %s176 = sphi 0, %s174
    %s177 = sphi 0, %s176
    %s191 = sphi 0, %s177
    %s195 = sphi 0, %s195
    %s197 = sphi 0, %s195
    %s198 = sphi 0, %s197
    %s212 = sphi 0, %s198
    %s216 = sphi 0, %s216
    %s218 = sphi 0, %s216
    %s219 = sphi 0, %s218
    %s233 = sphi 0, %s219
    %s237 = sphi 0, %s237
    %s239 = sphi 0, %s237
    %s240 = sphi 0, %s239
    %s254 = sphi 0, %s240
    %s258 = sphi 0, %s258
    %s260 = sphi 0, %s258
    %s261 = sphi 0, %s260
    %s275 = sphi 0, %s261
    %s279 = sphi 0, %s279
    %s281 = sphi 0, %s279
    %s282 = sphi 0, %s281
    %s296 = sphi 0, %s282
    %s300 = sphi 0, %s300
    %s302 = sphi 0, %s300
    %s303 = sphi 0, %s302
    %s317 = sphi 0, %s303
    %s321 = sphi 0, %s321
    %s323 = sphi 0, %s321
    %s324 = sphi 0, %s323
    %s338 = sphi 0, %s324
    %s346 = sphi 0, %s348
    %s349 = sphi 0, %s346
    %s350 = sphi 0, %s349
    %s366 = sphi 0, %s350
  $region4: #{tpu_custom_call.1} parent=0 // loop_header_branch
    %24 = sbr.rel (%p22) target = $region8
  $region5: #{tpu_custom_call.1} parent=0 // loop_body
    %s26 = ssub.s32 %s21, 1
    %s27 = ssub.s32 %s21, 2
    %s34 = sadd.s32 1, %s29
    %p35 = scmp.ge.s32.totalorder %s34, 4
    %s36 = scalar_select %p35, 0, %s34
    %s37 = sadd.s32 1, %s28
    %s38 = scalar_select %p35, %s37, %s28
    %p39 = scmp.ge.s32.totalorder %s38, 2
    %s40 = scalar_select %p39, 0, %s38
    %s41 = ssub.s32 %s28, %s40
    %s42 = ssub.s32 %s29, %s36
    %s43 = sor.u32 %s41, %s42
    %p44 = scmp.eq.s32.totalorder %s43, 0
    %s46 = sadd.s32 %s45, 1
    %s47 = scalar_select %p44, %s45, %s46
    %p50 = pneg %p44
    %p51 = scmp.eq.s32.totalorder %s21, 7
    %p52 = por %p50, %p51
    %p53 = scmp.ne.s32.totalorder %s45, %s48
    %p54 = scmp.eq.s32.totalorder %s21, 0
    %p55 = por %p53, %p54
    %p56 = scmp.ne.s32.totalorder %s45, %s48
    %p57 = scmp.eq.s32.totalorder %s26, 7
    %p58 = por %p56, %p57
    %p59 = scmp.ne.s32.totalorder %s48, %s49
    %p60 = scmp.eq.s32.totalorder %s26, 0
    %p61 = por %p59, %p60
    %p62 = scmp.ne.s32.totalorder %s48, %s49
    %p63 = scmp.eq.s32.totalorder %s27, 7
    %p64 = por %p62, %p63
    %p66 = scmp.ne.s32.totalorder %s49, %s65
    %p67 = scmp.eq.s32.totalorder %s27, 0
    %p68 = por %p66, %p67
    %s70 = sadd.s32 %s69, 1
    %p73 = scmp.eq.s32.totalorder %s21, 7
    %p74 = scmp.ne.s32.totalorder %s69, %s71
    %p75 = scmp.eq.s32.totalorder %s21, 0
    %p76 = por %p74, %p75
    %p77 = scmp.ne.s32.totalorder %s69, %s71
    %p78 = scmp.eq.s32.totalorder %s26, 7
    %p79 = por %p77, %p78
    %p80 = scmp.ne.s32.totalorder %s71, %s72
    %p81 = scmp.eq.s32.totalorder %s26, 0
    %p82 = por %p80, %p81
    %p83 = scmp.ne.s32.totalorder %s71, %s72
    %p84 = scmp.eq.s32.totalorder %s27, 7
    %p85 = por %p83, %p84
    %p87 = scmp.ne.s32.totalorder %s72, %s86
    %p88 = scmp.eq.s32.totalorder %s27, 0
    %p89 = por %p87, %p88
    %s91 = sadd.s32 %s90, 1
    %p94 = scmp.eq.s32.totalorder %s21, 7
    %p95 = scmp.ne.s32.totalorder %s90, %s92
    %p96 = scmp.eq.s32.totalorder %s21, 0
    %p97 = por %p95, %p96
    %p98 = scmp.ne.s32.totalorder %s90, %s92
    %p99 = scmp.eq.s32.totalorder %s26, 7
    %p100 = por %p98, %p99
    %p101 = scmp.ne.s32.totalorder %s92, %s93
    %p102 = scmp.eq.s32.totalorder %s26, 0
    %p103 = por %p101, %p102
    %p104 = scmp.ne.s32.totalorder %s92, %s93
    %p105 = scmp.eq.s32.totalorder %s27, 7
    %p106 = por %p104, %p105
    %p108 = scmp.ne.s32.totalorder %s93, %s107
    %p109 = scmp.eq.s32.totalorder %s27, 0
    %p110 = por %p108, %p109
    %s112 = sadd.s32 %s111, 1
    %p115 = scmp.eq.s32.totalorder %s21, 7
    %p116 = scmp.ne.s32.totalorder %s111, %s113
    %p117 = scmp.eq.s32.totalorder %s21, 0
    %p118 = por %p116, %p117
    %p119 = scmp.ne.s32.totalorder %s111, %s113
    %p120 = scmp.eq.s32.totalorder %s26, 7
    %p121 = por %p119, %p120
    %p122 = scmp.ne.s32.totalorder %s113, %s114
    %p123 = scmp.eq.s32.totalorder %s26, 0
    %p124 = por %p122, %p123
    %p125 = scmp.ne.s32.totalorder %s113, %s114
    %p126 = scmp.eq.s32.totalorder %s27, 7
    %p127 = por %p125, %p126
    %p129 = scmp.ne.s32.totalorder %s114, %s128
    %p130 = scmp.eq.s32.totalorder %s27, 0
    %p131 = por %p129, %p130
    %s133 = sadd.s32 %s132, 1
    %p136 = scmp.eq.s32.totalorder %s21, 7
    %p137 = scmp.ne.s32.totalorder %s132, %s134
    %p138 = scmp.eq.s32.totalorder %s21, 0
    %p139 = por %p137, %p138
    %p140 = scmp.ne.s32.totalorder %s132, %s134
    %p141 = scmp.eq.s32.totalorder %s26, 7
    %p142 = por %p140, %p141
    %p143 = scmp.ne.s32.totalorder %s134, %s135
    %p144 = scmp.eq.s32.totalorder %s26, 0
    %p145 = por %p143, %p144
    %p146 = scmp.ne.s32.totalorder %s134, %s135
    %p147 = scmp.eq.s32.totalorder %s27, 7
    %p148 = por %p146, %p147
    %p150 = scmp.ne.s32.totalorder %s135, %s149
    %p151 = scmp.eq.s32.totalorder %s27, 0
    %p152 = por %p150, %p151
    %s154 = sadd.s32 %s153, 1
    %p157 = scmp.eq.s32.totalorder %s21, 7
    %p158 = scmp.ne.s32.totalorder %s153, %s155
    %p159 = scmp.eq.s32.totalorder %s21, 0
    %p160 = por %p158, %p159
    %p161 = scmp.ne.s32.totalorder %s153, %s155
    %p162 = scmp.eq.s32.totalorder %s26, 7
    %p163 = por %p161, %p162
    %p164 = scmp.ne.s32.totalorder %s155, %s156
    %p165 = scmp.eq.s32.totalorder %s26, 0
    %p166 = por %p164, %p165
    %p167 = scmp.ne.s32.totalorder %s155, %s156
    %p168 = scmp.eq.s32.totalorder %s27, 7
    %p169 = por %p167, %p168
    %p171 = scmp.ne.s32.totalorder %s156, %s170
    %p172 = scmp.eq.s32.totalorder %s27, 0
    %p173 = por %p171, %p172
    %s175 = sadd.s32 %s174, 1
    %p178 = scmp.eq.s32.totalorder %s21, 7
    %p179 = scmp.ne.s32.totalorder %s174, %s176
    %p180 = scmp.eq.s32.totalorder %s21, 0
    %p181 = por %p179, %p180
    %p182 = scmp.ne.s32.totalorder %s174, %s176
    %p183 = scmp.eq.s32.totalorder %s26, 7
    %p184 = por %p182, %p183
    %p185 = scmp.ne.s32.totalorder %s176, %s177
    %p186 = scmp.eq.s32.totalorder %s26, 0
    %p187 = por %p185, %p186
    %p188 = scmp.ne.s32.totalorder %s176, %s177
    %p189 = scmp.eq.s32.totalorder %s27, 7
    %p190 = por %p188, %p189
    %p192 = scmp.ne.s32.totalorder %s177, %s191
    %p193 = scmp.eq.s32.totalorder %s27, 0
    %p194 = por %p192, %p193
    %s196 = sadd.s32 %s195, 1
    %p199 = scmp.eq.s32.totalorder %s21, 7
    %p200 = scmp.ne.s32.totalorder %s195, %s197
    %p201 = scmp.eq.s32.totalorder %s21, 0
    %p202 = por %p200, %p201
    %p203 = scmp.ne.s32.totalorder %s195, %s197
    %p204 = scmp.eq.s32.totalorder %s26, 7
    %p205 = por %p203, %p204
    %p206 = scmp.ne.s32.totalorder %s197, %s198
    %p207 = scmp.eq.s32.totalorder %s26, 0
    %p208 = por %p206, %p207
    %p209 = scmp.ne.s32.totalorder %s197, %s198
    %p210 = scmp.eq.s32.totalorder %s27, 7
    %p211 = por %p209, %p210
    %p213 = scmp.ne.s32.totalorder %s198, %s212
    %p214 = scmp.eq.s32.totalorder %s27, 0
    %p215 = por %p213, %p214
    %s217 = sadd.s32 %s216, 1
    %p220 = scmp.eq.s32.totalorder %s21, 7
    %p221 = scmp.ne.s32.totalorder %s216, %s218
    %p222 = scmp.eq.s32.totalorder %s21, 0
    %p223 = por %p221, %p222
    %p224 = scmp.ne.s32.totalorder %s216, %s218
    %p225 = scmp.eq.s32.totalorder %s26, 7
    %p226 = por %p224, %p225
    %p227 = scmp.ne.s32.totalorder %s218, %s219
    %p228 = scmp.eq.s32.totalorder %s26, 0
    %p229 = por %p227, %p228
    %p230 = scmp.ne.s32.totalorder %s218, %s219
    %p231 = scmp.eq.s32.totalorder %s27, 7
    %p232 = por %p230, %p231
    %p234 = scmp.ne.s32.totalorder %s219, %s233
    %p235 = scmp.eq.s32.totalorder %s27, 0
    %p236 = por %p234, %p235
    %s238 = sadd.s32 %s237, 1
    %p241 = scmp.eq.s32.totalorder %s21, 7
    %p242 = scmp.ne.s32.totalorder %s237, %s239
    %p243 = scmp.eq.s32.totalorder %s21, 0
    %p244 = por %p242, %p243
    %p245 = scmp.ne.s32.totalorder %s237, %s239
    %p246 = scmp.eq.s32.totalorder %s26, 7
    %p247 = por %p245, %p246
    %p248 = scmp.ne.s32.totalorder %s239, %s240
    %p249 = scmp.eq.s32.totalorder %s26, 0
    %p250 = por %p248, %p249
    %p251 = scmp.ne.s32.totalorder %s239, %s240
    %p252 = scmp.eq.s32.totalorder %s27, 7
    %p253 = por %p251, %p252
    %p255 = scmp.ne.s32.totalorder %s240, %s254
    %p256 = scmp.eq.s32.totalorder %s27, 0
    %p257 = por %p255, %p256
    %s259 = sadd.s32 %s258, 1
    %p262 = scmp.eq.s32.totalorder %s21, 7
    %p263 = scmp.ne.s32.totalorder %s258, %s260
    %p264 = scmp.eq.s32.totalorder %s21, 0
    %p265 = por %p263, %p264
    %p266 = scmp.ne.s32.totalorder %s258, %s260
    %p267 = scmp.eq.s32.totalorder %s26, 7
    %p268 = por %p266, %p267
    %p269 = scmp.ne.s32.totalorder %s260, %s261
    %p270 = scmp.eq.s32.totalorder %s26, 0
    %p271 = por %p269, %p270
    %p272 = scmp.ne.s32.totalorder %s260, %s261
    %p273 = scmp.eq.s32.totalorder %s27, 7
    %p274 = por %p272, %p273
    %p276 = scmp.ne.s32.totalorder %s261, %s275
    %p277 = scmp.eq.s32.totalorder %s27, 0
    %p278 = por %p276, %p277
    %s280 = sadd.s32 %s279, 1
    %p283 = scmp.eq.s32.totalorder %s21, 7
    %p284 = scmp.ne.s32.totalorder %s279, %s281
    %p285 = scmp.eq.s32.totalorder %s21, 0
    %p286 = por %p284, %p285
    %p287 = scmp.ne.s32.totalorder %s279, %s281
    %p288 = scmp.eq.s32.totalorder %s26, 7
    %p289 = por %p287, %p288
    %p290 = scmp.ne.s32.totalorder %s281, %s282
    %p291 = scmp.eq.s32.totalorder %s26, 0
    %p292 = por %p290, %p291
    %p293 = scmp.ne.s32.totalorder %s281, %s282
    %p294 = scmp.eq.s32.totalorder %s27, 7
    %p295 = por %p293, %p294
    %p297 = scmp.ne.s32.totalorder %s282, %s296
    %p298 = scmp.eq.s32.totalorder %s27, 0
    %p299 = por %p297, %p298
    %s301 = sadd.s32 %s300, 1
    %p304 = scmp.eq.s32.totalorder %s21, 7
    %p305 = scmp.ne.s32.totalorder %s300, %s302
    %p306 = scmp.eq.s32.totalorder %s21, 0
    %p307 = por %p305, %p306
    %p308 = scmp.ne.s32.totalorder %s300, %s302
    %p309 = scmp.eq.s32.totalorder %s26, 7
    %p310 = por %p308, %p309
    %p311 = scmp.ne.s32.totalorder %s302, %s303
    %p312 = scmp.eq.s32.totalorder %s26, 0
    %p313 = por %p311, %p312
    %p314 = scmp.ne.s32.totalorder %s302, %s303
    %p315 = scmp.eq.s32.totalorder %s27, 7
    %p316 = por %p314, %p315
    %p318 = scmp.ne.s32.totalorder %s303, %s317
    %p319 = scmp.eq.s32.totalorder %s27, 0
    %p320 = por %p318, %p319
    %s322 = sadd.s32 %s321, 1
    %p325 = scmp.eq.s32.totalorder %s21, 7
    %p326 = scmp.ne.s32.totalorder %s321, %s323
    %p327 = scmp.eq.s32.totalorder %s21, 0
    %p328 = por %p326, %p327
    %p329 = scmp.ne.s32.totalorder %s321, %s323
    %p330 = scmp.eq.s32.totalorder %s26, 7
    %p331 = por %p329, %p330
    %p332 = scmp.ne.s32.totalorder %s323, %s324
    %p333 = scmp.eq.s32.totalorder %s26, 0
    %p334 = por %p332, %p333
    %p335 = scmp.ne.s32.totalorder %s323, %s324
    %p336 = scmp.eq.s32.totalorder %s27, 7
    %p337 = por %p335, %p336
    %p339 = scmp.ne.s32.totalorder %s324, %s338
    %p340 = scmp.eq.s32.totalorder %s27, 0
    %p341 = por %p339, %p340
    %s342 = ssub.s32 %s28, %s40
    %s343 = ssub.s32 %s29, %s36
    %s344 = sor.u32 %s342, %s343
    %p345 = scmp.eq.s32.totalorder %s344, 0
    %s347 = sadd.s32 %s346, 1
    %s348 = scalar_select %p345, %s346, %s347
    %p351 = pneg %p345
    %p352 = scmp.eq.s32.totalorder %s21, 7
    %p353 = por %p351, %p352
    %p354 = scmp.ne.s32.totalorder %s346, %s349
    %p355 = scmp.eq.s32.totalorder %s21, 0
    %p356 = por %p354, %p355
    %p357 = scmp.ne.s32.totalorder %s346, %s349
    %p358 = scmp.eq.s32.totalorder %s26, 7
    %p359 = por %p357, %p358
    %p360 = scmp.ne.s32.totalorder %s349, %s350
    %p361 = scmp.eq.s32.totalorder %s26, 0
    %p362 = por %p360, %p361
    %p363 = scmp.ne.s32.totalorder %s349, %s350
    %p364 = scmp.eq.s32.totalorder %s27, 7
    %p365 = por %p363, %p364
    %p367 = scmp.ne.s32.totalorder %s350, %s366
    %p368 = scmp.eq.s32.totalorder %s27, 0
    %p369 = por %p367, %p368
    %p370 = scmp.le.s32.totalorder 1, %s21
    %p371 = scmp.lt.s32.totalorder %s21, 9
    %p372 = pnand %p370, %p371
    %p373 = pneg %p372
    // Predicated region
    $region9: #{tpu_custom_call.1} parent=5 // pred_check
      _
    $region10: #{tpu_custom_call.1} parent=5 // pred_check_branch
      %375 = sbr.rel (%p372) target = $region12
    $region11: #{tpu_custom_call.1} parent=5 // pred_region
      %s376 = ssub.s32 %s21, 1
      // Predicated region
      $region13: #{tpu_custom_call.1} parent=11 // pred_check
        %p377 = pneg %p82
      $region14: #{tpu_custom_call.1} parent=11 // pred_check_branch
        %379 = sbr.rel (%p377) target = $region16
      $region15: #{tpu_custom_call.1} parent=11 // pred_region
        _
      $region16: #{tpu_custom_call.1} parent=11 // pred_fallthru
        _
      // Predicated region
      $region17: #{tpu_custom_call.1} parent=11 // pred_check
        %p380 = pneg %p103
      $region18: #{tpu_custom_call.1} parent=11 // pred_check_branch
        %382 = sbr.rel (%p380) target = $region20
      $region19: #{tpu_custom_call.1} parent=11 // pred_region
        _
      $region20: #{tpu_custom_call.1} parent=11 // pred_fallthru
        _
      // Predicated region
      $region21: #{tpu_custom_call.1} parent=11 // pred_check
        %p383 = pneg %p124
      $region22: #{tpu_custom_call.1} parent=11 // pred_check_branch
        %385 = sbr.rel (%p383) target = $region24
      $region23: #{tpu_custom_call.1} parent=11 // pred_region
        _
      $region24: #{tpu_custom_call.1} parent=11 // pred_fallthru
        _
      // Predicated region
      $region25: #{tpu_custom_call.1} parent=11 // pred_check
        %p386 = pneg %p145
      $region26: #{tpu_custom_call.1} parent=11 // pred_check_branch
        %388 = sbr.rel (%p386) target = $region28
      $region27: #{tpu_custom_call.1} parent=11 // pred_region
        _
      $region28: #{tpu_custom_call.1} parent=11 // pred_fallthru
        _
      // Predicated region
      $region29: #{tpu_custom_call.1} parent=11 // pred_check
        %p389 = pneg %p166
      $region30: #{tpu_custom_call.1} parent=11 // pred_check_branch
        %391 = sbr.rel (%p389) target = $region32
      $region31: #{tpu_custom_call.1} parent=11 // pred_region
        _
      $region32: #{tpu_custom_call.1} parent=11 // pred_fallthru
        _
      // Predicated region
      $region33: #{tpu_custom_call.1} parent=11 // pred_check
        %p392 = pneg %p187
      $region34: #{tpu_custom_call.1} parent=11 // pred_check_branch
        %394 = sbr.rel (%p392) target = $region36
      $region35: #{tpu_custom_call.1} parent=11 // pred_region
        _
      $region36: #{tpu_custom_call.1} parent=11 // pred_fallthru
        _
      // Predicated region
      $region37: #{tpu_custom_call.1} parent=11 // pred_check
        %p395 = pneg %p208
      $region38: #{tpu_custom_call.1} parent=11 // pred_check_branch
        %397 = sbr.rel (%p395) target = $region40
      $region39: #{tpu_custom_call.1} parent=11 // pred_region
        _
      $region40: #{tpu_custom_call.1} parent=11 // pred_fallthru
        _
      // Predicated region
      $region41: #{tpu_custom_call.1} parent=11 // pred_check
        %p398 = pneg %p229
      $region42: #{tpu_custom_call.1} parent=11 // pred_check_branch
        %400 = sbr.rel (%p398) target = $region44
      $region43: #{tpu_custom_call.1} parent=11 // pred_region
        _
      $region44: #{tpu_custom_call.1} parent=11 // pred_fallthru
        _
      // Predicated region
      $region45: #{tpu_custom_call.1} parent=11 // pred_check
        %p401 = pneg %p250
      $region46: #{tpu_custom_call.1} parent=11 // pred_check_branch
        %403 = sbr.rel (%p401) target = $region48
      $region47: #{tpu_custom_call.1} parent=11 // pred_region
        _
      $region48: #{tpu_custom_call.1} parent=11 // pred_fallthru
        _
      // Predicated region
      $region49: #{tpu_custom_call.1} parent=11 // pred_check
        %p404 = pneg %p271
      $region50: #{tpu_custom_call.1} parent=11 // pred_check_branch
        %406 = sbr.rel (%p404) target = $region52
      $region51: #{tpu_custom_call.1} parent=11 // pred_region
        _
      $region52: #{tpu_custom_call.1} parent=11 // pred_fallthru
        _
      // Predicated region
      $region53: #{tpu_custom_call.1} parent=11 // pred_check
        %p407 = pneg %p292
      $region54: #{tpu_custom_call.1} parent=11 // pred_check_branch
        %409 = sbr.rel (%p407) target = $region56
      $region55: #{tpu_custom_call.1} parent=11 // pred_region
        _
      $region56: #{tpu_custom_call.1} parent=11 // pred_fallthru
        _
      // Predicated region
      $region57: #{tpu_custom_call.1} parent=11 // pred_check
        %p410 = pneg %p313
      $region58: #{tpu_custom_call.1} parent=11 // pred_check_branch
        %412 = sbr.rel (%p410) target = $region60
      $region59: #{tpu_custom_call.1} parent=11 // pred_region
        _
      $region60: #{tpu_custom_call.1} parent=11 // pred_fallthru
        _
      // Predicated region
      $region61: #{tpu_custom_call.1} parent=11 // pred_check
        %p413 = pneg %p334
      $region62: #{tpu_custom_call.1} parent=11 // pred_check_branch
        %415 = sbr.rel (%p413) target = $region64
      $region63: #{tpu_custom_call.1} parent=11 // pred_region
        _
      $region64: #{tpu_custom_call.1} parent=11 // pred_fallthru
        _
    $region12: #{tpu_custom_call.1} parent=5 // pred_fallthru
      _
    %p416 = scmp.lt.s32.totalorder %s21, 8
    // Predicated region
    $region65: #{tpu_custom_call.1} parent=5 // pred_check
      %p417 = pneg %p416
    $region66: #{tpu_custom_call.1} parent=5 // pred_check_branch
      %419 = sbr.rel (%p417) target = $region68
    $region67: #{tpu_custom_call.1} parent=5 // pred_region
      // Predicated region
      $region69: #{tpu_custom_call.1} parent=67 // pred_check
        %p420 = pneg %p55
      $region70: #{tpu_custom_call.1} parent=67 // pred_check_branch
        %422 = sbr.rel (%p420) target = $region72
      $region71: #{tpu_custom_call.1} parent=67 // pred_region
        %s423 = smul.u32 16, %s29
        %p424 = scmp.lt.s32.totalorder %s28, 1
        %s425 = scalar_select %p424, %s28, 1
        %p426 = scmp.lt.s32.totalorder %s423, 63
        %s427 = scalar_select %p426, %s423, 63
        %s428 = smul.addr %s425, 64
        %s429 = sadd.s32 %s427, %s428
        %s430 = smul.addr %s429, 8
        %s431 = scalar_lea.vmem %s0, %s430
        %s432 = smul.u32 16, %s29
      $region72: #{tpu_custom_call.1} parent=67 // pred_fallthru
        _
    $region68: #{tpu_custom_call.1} parent=5 // pred_fallthru
      _
    %p433 = scmp.le.s32.totalorder 1, %s21
    %p434 = scmp.lt.s32.totalorder %s21, 9
    %p435 = pnand %p433, %p434
    %p436 = pneg %p435
    // Predicated region
    $region73: #{tpu_custom_call.1} parent=5 // pred_check
      _
    $region74: #{tpu_custom_call.1} parent=5 // pred_check_branch
      %438 = sbr.rel (%p435) target = $region76
    $region75: #{tpu_custom_call.1} parent=5 // pred_region
      %s439 = ssub.s32 %s21, 1
      %s440 = smul.u32 16, %s31
      %p441 = scmp.lt.s32.totalorder %s30, 1
      %s442 = scalar_select %p441, %s30, 1
      %p443 = scmp.lt.s32.totalorder %s440, 63
      %s444 = scalar_select %p443, %s440, 63
      %s445 = smul.addr %s442, 64
      %s446 = sadd.s32 %s444, %s445
      %s447 = smul.addr %s446, 8
      %s448 = scalar_lea.vmem %s0, %s447
      %p449 = pneg %p61
      %p450 = pneg %p58
      %p451 = pneg %p82
      %p452 = pneg %p79
      %p453 = pneg %p103
      %p454 = pneg %p100
      %p455 = pneg %p124
      %p456 = pneg %p121
      %p457 = pneg %p145
      %p458 = pneg %p142
      %p459 = pneg %p166
      %p460 = pneg %p163
      %p461 = pneg %p187
      %p462 = pneg %p184
      %p463 = pneg %p208
      %p464 = pneg %p205
      %p465 = pneg %p229
      %p466 = pneg %p226
      %p467 = pneg %p250
      %p468 = pneg %p247
      %p469 = pneg %p271
      %p470 = pneg %p268
      %p471 = pneg %p292
      %p472 = pneg %p289
      %p473 = pneg %p313
      %p474 = pneg %p310
      %p475 = pneg %p334
      %p476 = pneg %p331
      %p477 = pneg %p362
      %p478 = pneg %p359
      %s479 = smul.u32 16, %s31
      %p480 = scmp.lt.s32.totalorder %s30, 1
      %s481 = scalar_select %p480, %s30, 1
      %p482 = scmp.lt.s32.totalorder %s479, 63
      %s483 = scalar_select %p482, %s479, 63
      %s484 = smul.addr %s481, 64
      %s485 = sadd.s32 %s483, %s484
      %s486 = smul.addr %s485, 8
      %s487 = scalar_lea.vmem %s14, %s486
      %s488 = smul.u32 16, %s31
      %p489 = scmp.lt.s32.totalorder %s30, 1
      %s490 = scalar_select %p489, %s30, 1
      %p491 = scmp.lt.s32.totalorder %s488, 63
      %s492 = scalar_select %p491, %s488, 63
      %s493 = smul.addr %s490, 64
      %s494 = sadd.s32 %s492, %s493
      %s495 = smul.addr %s494, 8
      %s496 = scalar_lea.vmem %s0, %s495
      %s497 = smul.u32 16, %s31
      %s498 = smul.u32 16, %s31
      %p499 = scmp.lt.s32.totalorder %s30, 1
      %s500 = scalar_select %p499, %s30, 1
      %p501 = scmp.lt.s32.totalorder %s498, 63
      %s502 = scalar_select %p501, %s498, 63
      %s503 = smul.addr %s500, 64
      %s504 = sadd.s32 %s502, %s503
      %s505 = smul.addr %s504, 8
      %s506 = scalar_lea.vmem %s14, %s505
      %s507 = smul.u32 16, %s31
      %v508 = vld [vmem:[%s496] sm:$0xff]
      %v509 = vld [vmem:[%s496 + $0x8] sm:$0xff]
      %v510 = vld [vmem:[%s496 + $0x10] sm:$0xff]
      %v511 = vld [vmem:[%s496 + $0x18] sm:$0xff]
      %v512 = vld [vmem:[%s496 + $0x20] sm:$0xff]
      %v513 = vld [vmem:[%s496 + $0x28] sm:$0xff]
      %v514 = vld [vmem:[%s496 + $0x30] sm:$0xff]
      %v515 = vld [vmem:[%s496 + $0x38] sm:$0xff]
      %v516 = vld [vmem:[%s496 + $0x40] sm:$0xff]
      %v517 = vld [vmem:[%s496 + $0x48] sm:$0xff]
      %v518 = vld [vmem:[%s496 + $0x50] sm:$0xff]
      %v519 = vld [vmem:[%s496 + $0x58] sm:$0xff]
      %v520 = vld [vmem:[%s496 + $0x60] sm:$0xff]
      %v521 = vld [vmem:[%s496 + $0x68] sm:$0xff]
      %v522 = vld [vmem:[%s496 + $0x70] sm:$0xff]
      %v523 = vld [vmem:[%s496 + $0x78] sm:$0xff]
      %v524 = vtanh.pop %v508
      %v525 = vtanh.pop %v509
      %v526 = vtanh.pop %v510
      %v527 = vtanh.pop %v511
      %v528 = vtanh.pop %v512
      %v529 = vtanh.pop %v513
      %v530 = vtanh.pop %v514
      %v531 = vtanh.pop %v515
      %v532 = vtanh.pop %v516
      %v533 = vtanh.pop %v517
      %v534 = vtanh.pop %v518
      %v535 = vtanh.pop %v519
      %v536 = vtanh.pop %v520
      %v537 = vtanh.pop %v521
      %v538 = vtanh.pop %v522
      %v539 = vtanh.pop %v523
      %v540 = vld [vmem:[%s1] sm:$0xff]
      %v541 = vld [vmem:[%s2] sm:$0x1]
      %v543 = vlaneseq
      %v544 = vshrl.u32 %v543, 7
      %v545 = vsub.s32 0, %v544
      %v546 = vrot.slane %v541, %v545
      %vm548 = vcmask 64512
      %v550 = vsel %vm548, %v524, 0
      %v553 = vsel %vm548, %v525, 0
      %v556 = vsel %vm548, %v526, 0
      %v559 = vsel %vm548, %v527, 0
      %v562 = vsel %vm548, %v528, 0
      %v565 = vsel %vm548, %v529, 0
      %v568 = vsel %vm548, %v530, 0
      %v571 = vsel %vm548, %v531, 0
      %v574 = vsel %vm548, %v532, 0
      %v577 = vsel %vm548, %v533, 0
      %v580 = vsel %vm548, %v534, 0
      %v583 = vsel %vm548, %v535, 0
      %v586 = vsel %vm548, %v536, 0
      %v589 = vsel %vm548, %v537, 0
      %v592 = vsel %vm548, %v538, 0
      %v595 = vsel %vm548, %v539, 0
      %597 = vmatprep.subr.mxu0 0.0
      %598 = vmatpush1.msra.mxu0 0.0
      %599 = vmatprep.subr.mxu0 0.0
      %600 = vmatpush1.msra.mxu0 0.0
      %601 = vmatprep.subr.mxu0 0.0
      %602 = vmatpush1.msra.mxu0 0.0
      %603 = vmatprep.subr.mxu0 0.0
      %604 = vmatpush1.msra.mxu0 0.0
      %605 = vmatprep.subr.mxu0 0.0
      %606 = vmatpush1.msra.mxu0 0.0
      %607 = vmatprep.subr.mxu0 0.0
      %608 = vmatpush1.msra.mxu0 0.0
      %609 = vmatprep.subr.mxu0 0.0
      %610 = vmatpush1.msra.mxu0 0.0
      %611 = vmatprep.subr.mxu0 0.0
      %612 = vmatpush1.msra.mxu0 0.0
      %613 = vmatprep.subr.mxu0 0.0
      %614 = vmatpush1.msra.mxu0 0.0
      %615 = vmatprep.subr.mxu0 0.0
      %616 = vmatpush1.msra.mxu0 0.0
      %617 = vmatprep.subr.mxu0 0.0
      %618 = vmatpush1.msra.mxu0 0.0
      %619 = vmatprep.subr.mxu0 0.0
      %620 = vmatpush1.msra.mxu0 0.0
      %621 = vmatprep.subr.mxu0 0.0
      %622 = vmatpush1.msra.mxu0 0.0
      %623 = vmatprep.subr.mxu0 0.0
      %624 = vmatpush1.msra.mxu0 0.0
      %625 = vmatprep.subr.mxu0 0.0
      %626 = vmatpush1.msra.mxu0 0.0
      %627 = vmatprep.subr.mxu0 0.0
      %628 = vmatpush1.msra.mxu0 %v540
      %629 = vmatprep.subr.mxu0 0.0
      %630 = vmatpush2.msra.mxu0 0.0
      %631 = vmatprep.subr.mxu0 0.0
      %632 = vmatpush2.msra.mxu0 0.0
      %633 = vmatprep.subr.mxu0 0.0
      %634 = vmatpush2.msra.mxu0 0.0
      %635 = vmatprep.subr.mxu0 0.0
      %636 = vmatpush2.msra.mxu0 0.0
      %637 = vmatprep.subr.mxu0 0.0
      %638 = vmatpush2.msra.mxu0 0.0
      %639 = vmatprep.subr.mxu0 0.0
      %640 = vmatpush2.msra.mxu0 0.0
      %641 = vmatprep.subr.mxu0 0.0
      %642 = vmatpush2.msra.mxu0 0.0
      %643 = vmatprep.subr.mxu0 0.0
      %644 = vmatpush2.msra.mxu0 0.0
      %645 = vmatprep.subr.mxu0 0.0
      %646 = vmatpush2.msra.mxu0 0.0
      %647 = vmatprep.subr.mxu0 0.0
      %648 = vmatpush2.msra.mxu0 0.0
      %649 = vmatprep.subr.mxu0 0.0
      %650 = vmatpush2.msra.mxu0 0.0
      %651 = vmatprep.subr.mxu0 0.0
      %652 = vmatpush2.msra.mxu0 0.0
      %653 = vmatprep.subr.mxu0 0.0
      %654 = vmatpush2.msra.mxu0 0.0
      %655 = vmatprep.subr.mxu0 0.0
      %656 = vmatpush2.msra.mxu0 0.0
      %657 = vmatprep.subr.mxu0 0.0
      %658 = vmatpush2.msra.mxu0 0.0
      %659 = vmatprep.subr.mxu0 0.0
      %660 = vmatpush2.msra.mxu0 0.0
      %661 = vmatprep.mubr.f32.mxu0 0.0
      %662 = vmatmul.mubr.f32.gmra.mxu0 %v550
      %v663 = vpop.f32.mrf.mxu0
      %v664 = vadd.f32 %v546, %v663
      %v665 = vpop.f32.mrf.mxu0
      %666 = vmatprep.mubr.f32.mxu0 0.0
      %667 = vmatmul.mubr.f32.gmra.mxu0 %v553
      %v668 = vpop.f32.mrf.mxu0
      %v669 = vadd.f32 %v546, %v668
      %v670 = vpop.f32.mrf.mxu0
      %671 = vmatprep.mubr.f32.mxu0 0.0
      %672 = vmatmul.mubr.f32.gmra.mxu0 %v556
      %v673 = vpop.f32.mrf.mxu0
      %v674 = vadd.f32 %v546, %v673
      %v675 = vpop.f32.mrf.mxu0
      %676 = vmatprep.mubr.f32.mxu0 0.0
      %677 = vmatmul.mubr.f32.gmra.mxu0 %v559
      %v678 = vpop.f32.mrf.mxu0
      %v679 = vadd.f32 %v546, %v678
      %v680 = vpop.f32.mrf.mxu0
      %681 = vmatprep.mubr.f32.mxu0 0.0
      %682 = vmatmul.mubr.f32.gmra.mxu0 %v562
      %v683 = vpop.f32.mrf.mxu0
      %v684 = vadd.f32 %v546, %v683
      %v685 = vpop.f32.mrf.mxu0
      %686 = vmatprep.mubr.f32.mxu0 0.0
      %687 = vmatmul.mubr.f32.gmra.mxu0 %v565
      %v688 = vpop.f32.mrf.mxu0
      %v689 = vadd.f32 %v546, %v688
      %v690 = vpop.f32.mrf.mxu0
      %691 = vmatprep.mubr.f32.mxu0 0.0
      %692 = vmatmul.mubr.f32.gmra.mxu0 %v568
      %v693 = vpop.f32.mrf.mxu0
      %v694 = vadd.f32 %v546, %v693
      %v695 = vpop.f32.mrf.mxu0
      %696 = vmatprep.mubr.f32.mxu0 0.0
      %697 = vmatmul.mubr.f32.gmra.mxu0 %v571
      %v698 = vpop.f32.mrf.mxu0
      %v699 = vadd.f32 %v546, %v698
      %v700 = vpop.f32.mrf.mxu0
      %701 = vmatprep.mubr.f32.mxu0 0.0
      %702 = vmatmul.mubr.f32.gmra.mxu0 %v574
      %v703 = vpop.f32.mrf.mxu0
      %v704 = vadd.f32 %v546, %v703
      %v705 = vpop.f32.mrf.mxu0
      %706 = vmatprep.mubr.f32.mxu0 0.0
      %707 = vmatmul.mubr.f32.gmra.mxu0 %v577
      %v708 = vpop.f32.mrf.mxu0
      %v709 = vadd.f32 %v546, %v708
      %v710 = vpop.f32.mrf.mxu0
      %711 = vmatprep.mubr.f32.mxu0 0.0
      %712 = vmatmul.mubr.f32.gmra.mxu0 %v580
      %v713 = vpop.f32.mrf.mxu0
      %v714 = vadd.f32 %v546, %v713
      %v715 = vpop.f32.mrf.mxu0
      %716 = vmatprep.mubr.f32.mxu0 0.0
      %717 = vmatmul.mubr.f32.gmra.mxu0 %v583
      %v718 = vpop.f32.mrf.mxu0
      %v719 = vadd.f32 %v546, %v718
      %v720 = vpop.f32.mrf.mxu0
      %721 = vmatprep.mubr.f32.mxu0 0.0
      %722 = vmatmul.mubr.f32.gmra.mxu0 %v586
      %v723 = vpop.f32.mrf.mxu0
      %v724 = vadd.f32 %v546, %v723
      %v725 = vpop.f32.mrf.mxu0
      %726 = vmatprep.mubr.f32.mxu0 0.0
      %727 = vmatmul.mubr.f32.gmra.mxu0 %v589
      %v728 = vpop.f32.mrf.mxu0
      %v729 = vadd.f32 %v546, %v728
      %v730 = vpop.f32.mrf.mxu0
      %731 = vmatprep.mubr.f32.mxu0 0.0
      %732 = vmatmul.mubr.f32.gmra.mxu0 %v592
      %v733 = vpop.f32.mrf.mxu0
      %v734 = vadd.f32 %v546, %v733
      %v735 = vpop.f32.mrf.mxu0
      %736 = vmatprep.mubr.f32.mxu0 0.0
      %737 = vmatmul.mubr.f32.gmra.mxu0 %v595
      %v738 = vpop.f32.mrf.mxu0
      %v739 = vadd.f32 %v546, %v738
      %v740 = vpop.f32.mrf.mxu0
      %741 = vdwg.mxu0
      %v742 = vld [vmem:[%s3] sm:$0x1]
      %v743 = vld [vmem:[%s4] sm:$0x1]
      %vm744 = vcmask 130048
      %v745 = vsel %vm744, %v664, 0.0
      %746 = vadd.xlane.f32.xlu0 %v745
      %v747 = vpop.xlane.xlu0 %746
      %v748 = vsel %vm744, %v669, 0.0
      %749 = vadd.xlane.f32.xlu0 %v748
      %v750 = vpop.xlane.xlu0 %749
      %v751 = vsel %vm744, %v674, 0.0
      %752 = vadd.xlane.f32.xlu0 %v751
      %v753 = vpop.xlane.xlu0 %752
      %v754 = vsel %vm744, %v679, 0.0
      %755 = vadd.xlane.f32.xlu0 %v754
      %v756 = vpop.xlane.xlu0 %755
      %v757 = vsel %vm744, %v684, 0.0
      %758 = vadd.xlane.f32.xlu0 %v757
      %v759 = vpop.xlane.xlu0 %758
      %v760 = vsel %vm744, %v689, 0.0
      %761 = vadd.xlane.f32.xlu0 %v760
      %v762 = vpop.xlane.xlu0 %761
      %v763 = vsel %vm744, %v694, 0.0
      %764 = vadd.xlane.f32.xlu0 %v763
      %v765 = vpop.xlane.xlu0 %764
      %v766 = vsel %vm744, %v699, 0.0
      %767 = vadd.xlane.f32.xlu0 %v766
      %v768 = vpop.xlane.xlu0 %767
      %v769 = vsel %vm744, %v704, 0.0
      %770 = vadd.xlane.f32.xlu0 %v769
      %v771 = vpop.xlane.xlu0 %770
      %v772 = vsel %vm744, %v709, 0.0
      %773 = vadd.xlane.f32.xlu0 %v772
      %v774 = vpop.xlane.xlu0 %773
      %v775 = vsel %vm744, %v714, 0.0
      %776 = vadd.xlane.f32.xlu0 %v775
      %v777 = vpop.xlane.xlu0 %776
      %v778 = vsel %vm744, %v719, 0.0
      %779 = vadd.xlane.f32.xlu0 %v778
      %v780 = vpop.xlane.xlu0 %779
      %v781 = vsel %vm744, %v724, 0.0
      %782 = vadd.xlane.f32.xlu0 %v781
      %v783 = vpop.xlane.xlu0 %782
      %v784 = vsel %vm744, %v729, 0.0
      %785 = vadd.xlane.f32.xlu0 %v784
      %v786 = vpop.xlane.xlu0 %785
      %v787 = vsel %vm744, %v734, 0.0
      %788 = vadd.xlane.f32.xlu0 %v787
      %v789 = vpop.xlane.xlu0 %788
      %v790 = vsel %vm744, %v739, 0.0
      %791 = vadd.xlane.f32.xlu0 %v790
      %v792 = vpop.xlane.xlu0 %791
      %v793 = vrcp.pop 16.0
      %v794 = vmul.f32 %v747, %v793
      %v795 = vmul.f32 %v750, %v793
      %v796 = vmul.f32 %v753, %v793
      %v797 = vmul.f32 %v756, %v793
      %v798 = vmul.f32 %v759, %v793
      %v799 = vmul.f32 %v762, %v793
      %v800 = vmul.f32 %v765, %v793
      %v801 = vmul.f32 %v768, %v793
      %v802 = vmul.f32 %v771, %v793
      %v803 = vmul.f32 %v774, %v793
      %v804 = vmul.f32 %v777, %v793
      %v805 = vmul.f32 %v780, %v793
      %v806 = vmul.f32 %v783, %v793
      %v807 = vmul.f32 %v786, %v793
      %v808 = vmul.f32 %v789, %v793
      %v809 = vmul.f32 %v792, %v793
      %v810 = vsub.f32 %v664, %v794
      %v811 = vsub.f32 %v669, %v795
      %v812 = vsub.f32 %v674, %v796
      %v813 = vsub.f32 %v679, %v797
      %v814 = vsub.f32 %v684, %v798
      %v815 = vsub.f32 %v689, %v799
      %v816 = vsub.f32 %v694, %v800
      %v817 = vsub.f32 %v699, %v801
      %v818 = vsub.f32 %v704, %v802
      %v819 = vsub.f32 %v709, %v803
      %v820 = vsub.f32 %v714, %v804
      %v821 = vsub.f32 %v719, %v805
      %v822 = vsub.f32 %v724, %v806
      %v823 = vsub.f32 %v729, %v807
      %v824 = vsub.f32 %v734, %v808
      %v825 = vsub.f32 %v739, %v809
      %v826 = vmul.f32 %v810, %v810
      %v827 = vmul.f32 %v811, %v811
      %v828 = vmul.f32 %v812, %v812
      %v829 = vmul.f32 %v813, %v813
      %v830 = vmul.f32 %v814, %v814
      %v831 = vmul.f32 %v815, %v815
      %v832 = vmul.f32 %v816, %v816
      %v833 = vmul.f32 %v817, %v817
      %v834 = vmul.f32 %v818, %v818
      %v835 = vmul.f32 %v819, %v819
      %v836 = vmul.f32 %v820, %v820
      %v837 = vmul.f32 %v821, %v821
      %v838 = vmul.f32 %v822, %v822
      %v839 = vmul.f32 %v823, %v823
      %v840 = vmul.f32 %v824, %v824
      %v841 = vmul.f32 %v825, %v825
      %v842 = vsel %vm744, %v826, 0.0
      %843 = vadd.xlane.f32.xlu0 %v842
      %v844 = vpop.xlane.xlu0 %843
      %v845 = vsel %vm744, %v827, 0.0
      %846 = vadd.xlane.f32.xlu0 %v845
      %v847 = vpop.xlane.xlu0 %846
      %v848 = vsel %vm744, %v828, 0.0
      %849 = vadd.xlane.f32.xlu0 %v848
      %v850 = vpop.xlane.xlu0 %849
      %v851 = vsel %vm744, %v829, 0.0
      %852 = vadd.xlane.f32.xlu0 %v851
      %v853 = vpop.xlane.xlu0 %852
      %v854 = vsel %vm744, %v830, 0.0
      %855 = vadd.xlane.f32.xlu0 %v854
      %v856 = vpop.xlane.xlu0 %855
      %v857 = vsel %vm744, %v831, 0.0
      %858 = vadd.xlane.f32.xlu0 %v857
      %v859 = vpop.xlane.xlu0 %858
      %v860 = vsel %vm744, %v832, 0.0
      %861 = vadd.xlane.f32.xlu0 %v860
      %v862 = vpop.xlane.xlu0 %861
      %v863 = vsel %vm744, %v833, 0.0
      %864 = vadd.xlane.f32.xlu0 %v863
      %v865 = vpop.xlane.xlu0 %864
      %v866 = vsel %vm744, %v834, 0.0
      %867 = vadd.xlane.f32.xlu0 %v866
      %v868 = vpop.xlane.xlu0 %867
      %v869 = vsel %vm744, %v835, 0.0
      %870 = vadd.xlane.f32.xlu0 %v869
      %v871 = vpop.xlane.xlu0 %870
      %v872 = vsel %vm744, %v836, 0.0
      %873 = vadd.xlane.f32.xlu0 %v872
      %v874 = vpop.xlane.xlu0 %873
      %v875 = vsel %vm744, %v837, 0.0
      %876 = vadd.xlane.f32.xlu0 %v875
      %v877 = vpop.xlane.xlu0 %876
      %v878 = vsel %vm744, %v838, 0.0
      %879 = vadd.xlane.f32.xlu0 %v878
      %v880 = vpop.xlane.xlu0 %879
      %v881 = vsel %vm744, %v839, 0.0
      %882 = vadd.xlane.f32.xlu0 %v881
      %v883 = vpop.xlane.xlu0 %882
      %v884 = vsel %vm744, %v840, 0.0
      %885 = vadd.xlane.f32.xlu0 %v884
      %v886 = vpop.xlane.xlu0 %885
      %v887 = vsel %vm744, %v841, 0.0
      %888 = vadd.xlane.f32.xlu0 %v887
      %v889 = vpop.xlane.xlu0 %888
      %v890 = vmul.f32 %v844, %v793
      %v891 = vmul.f32 %v847, %v793
      %v892 = vmul.f32 %v850, %v793
      %v893 = vmul.f32 %v853, %v793
      %v894 = vmul.f32 %v856, %v793
      %v895 = vmul.f32 %v859, %v793
      %v896 = vmul.f32 %v862, %v793
      %v897 = vmul.f32 %v865, %v793
      %v898 = vmul.f32 %v868, %v793
      %v899 = vmul.f32 %v871, %v793
      %v900 = vmul.f32 %v874, %v793
      %v901 = vmul.f32 %v877, %v793
      %v902 = vmul.f32 %v880, %v793
      %v903 = vmul.f32 %v883, %v793
      %v904 = vmul.f32 %v886, %v793
      %v905 = vmul.f32 %v889, %v793
      %v906 = vadd.f32 %v890, 1e-05
      %v907 = vadd.f32 %v891, 1e-05
      %v908 = vadd.f32 %v892, 1e-05
      %v909 = vadd.f32 %v893, 1e-05
      %v910 = vadd.f32 %v894, 1e-05
      %v911 = vadd.f32 %v895, 1e-05
      %v912 = vadd.f32 %v896, 1e-05
      %v913 = vadd.f32 %v897, 1e-05
      %v914 = vadd.f32 %v898, 1e-05
      %v915 = vadd.f32 %v899, 1e-05
      %v916 = vadd.f32 %v900, 1e-05
      %v917 = vadd.f32 %v901, 1e-05
      %v918 = vadd.f32 %v902, 1e-05
      %v919 = vadd.f32 %v903, 1e-05
      %v920 = vadd.f32 %v904, 1e-05
      %v921 = vadd.f32 %v905, 1e-05
      %v922 = vrsqrt.pop %v906
      %v923 = vrsqrt.pop %v907
      %v924 = vrsqrt.pop %v908
      %v925 = vrsqrt.pop %v909
      %v926 = vrsqrt.pop %v910
      %v927 = vrsqrt.pop %v911
      %v928 = vrsqrt.pop %v912
      %v929 = vrsqrt.pop %v913
      %v930 = vrsqrt.pop %v914
      %v931 = vrsqrt.pop %v915
      %v932 = vrsqrt.pop %v916
      %v933 = vrsqrt.pop %v917
      %v934 = vrsqrt.pop %v918
      %v935 = vrsqrt.pop %v919
      %v936 = vrsqrt.pop %v920
      %v937 = vrsqrt.pop %v921
      %v938 = vmul.f32 %v810, %v922
      %v939 = vmul.f32 %v811, %v923
      %v940 = vmul.f32 %v812, %v924
      %v941 = vmul.f32 %v813, %v925
      %v942 = vmul.f32 %v814, %v926
      %v943 = vmul.f32 %v815, %v927
      %v944 = vmul.f32 %v816, %v928
      %v945 = vmul.f32 %v817, %v929
      %v946 = vmul.f32 %v818, %v930
      %v947 = vmul.f32 %v819, %v931
      %v948 = vmul.f32 %v820, %v932
      %v949 = vmul.f32 %v821, %v933
      %v950 = vmul.f32 %v822, %v934
      %v951 = vmul.f32 %v823, %v935
      %v952 = vmul.f32 %v824, %v936
      %v953 = vmul.f32 %v825, %v937
      %v955 = vlaneseq
      %v956 = vshrl.u32 %v955, 7
      %v957 = vsub.s32 0, %v956
      %v958 = vrot.slane %v742, %v957
      %v960 = vmul.f32 %v938, %v958
      %v961 = vmul.f32 %v939, %v958
      %v962 = vmul.f32 %v940, %v958
      %v963 = vmul.f32 %v941, %v958
      %v964 = vmul.f32 %v942, %v958
      %v965 = vmul.f32 %v943, %v958
      %v966 = vmul.f32 %v944, %v958
      %v967 = vmul.f32 %v945, %v958
      %v968 = vmul.f32 %v946, %v958
      %v969 = vmul.f32 %v947, %v958
      %v970 = vmul.f32 %v948, %v958
      %v971 = vmul.f32 %v949, %v958
      %v972 = vmul.f32 %v950, %v958
      %v973 = vmul.f32 %v951, %v958
      %v974 = vmul.f32 %v952, %v958
      %v975 = vmul.f32 %v953, %v958
      %v977 = vlaneseq
      %v978 = vshrl.u32 %v977, 7
      %v979 = vsub.s32 0, %v978
      %v980 = vrot.slane %v743, %v979
      %v982 = vadd.f32 %v960, %v980
      %v983 = vadd.f32 %v961, %v980
      %v984 = vadd.f32 %v962, %v980
      %v985 = vadd.f32 %v963, %v980
      %v986 = vadd.f32 %v964, %v980
      %v987 = vadd.f32 %v965, %v980
      %v988 = vadd.f32 %v966, %v980
      %v989 = vadd.f32 %v967, %v980
      %v990 = vadd.f32 %v968, %v980
      %v991 = vadd.f32 %v969, %v980
      %v992 = vadd.f32 %v970, %v980
      %v993 = vadd.f32 %v971, %v980
      %v994 = vadd.f32 %v972, %v980
      %v995 = vadd.f32 %v973, %v980
      %v996 = vadd.f32 %v974, %v980
      %v997 = vadd.f32 %v975, %v980
      %s998 = sld [smem:[#allocation3]]
      %vm999 = vcmp.ge.f32.partialorder %v982, 0.0
      %vm1000 = vcmp.ge.f32.partialorder %v983, 0.0
      %vm1001 = vcmp.ge.f32.partialorder %v984, 0.0
      %vm1002 = vcmp.ge.f32.partialorder %v985, 0.0
      %vm1003 = vcmp.ge.f32.partialorder %v986, 0.0
      %vm1004 = vcmp.ge.f32.partialorder %v987, 0.0
      %vm1005 = vcmp.ge.f32.partialorder %v988, 0.0
      %vm1006 = vcmp.ge.f32.partialorder %v989, 0.0
      %vm1007 = vcmp.ge.f32.partialorder %v990, 0.0
      %vm1008 = vcmp.ge.f32.partialorder %v991, 0.0
      %vm1009 = vcmp.ge.f32.partialorder %v992, 0.0
      %vm1010 = vcmp.ge.f32.partialorder %v993, 0.0
      %vm1011 = vcmp.ge.f32.partialorder %v994, 0.0
      %vm1012 = vcmp.ge.f32.partialorder %v995, 0.0
      %vm1013 = vcmp.ge.f32.partialorder %v996, 0.0
      %vm1014 = vcmp.ge.f32.partialorder %v997, 0.0
      %v1015 = vstv %s998
      %v1016 = vmul.f32 %v1015, %v982
      %v1017 = vmul.f32 %v1015, %v983
      %v1018 = vmul.f32 %v1015, %v984
      %v1019 = vmul.f32 %v1015, %v985
      %v1020 = vmul.f32 %v1015, %v986
      %v1021 = vmul.f32 %v1015, %v987
      %v1022 = vmul.f32 %v1015, %v988
      %v1023 = vmul.f32 %v1015, %v989
      %v1024 = vmul.f32 %v1015, %v990
      %v1025 = vmul.f32 %v1015, %v991
      %v1026 = vmul.f32 %v1015, %v992
      %v1027 = vmul.f32 %v1015, %v993
      %v1028 = vmul.f32 %v1015, %v994
      %v1029 = vmul.f32 %v1015, %v995
      %v1030 = vmul.f32 %v1015, %v996
      %v1031 = vmul.f32 %v1015, %v997
      %v1032 = vsel %vm999, %v982, %v1016
      %v1033 = vsel %vm1000, %v983, %v1017
      %v1034 = vsel %vm1001, %v984, %v1018
      %v1035 = vsel %vm1002, %v985, %v1019
      %v1036 = vsel %vm1003, %v986, %v1020
      %v1037 = vsel %vm1004, %v987, %v1021
      %v1038 = vsel %vm1005, %v988, %v1022
      %v1039 = vsel %vm1006, %v989, %v1023
      %v1040 = vsel %vm1007, %v990, %v1024
      %v1041 = vsel %vm1008, %v991, %v1025
      %v1042 = vsel %vm1009, %v992, %v1026
      %v1043 = vsel %vm1010, %v993, %v1027
      %v1044 = vsel %vm1011, %v994, %v1028
      %v1045 = vsel %vm1012, %v995, %v1029
      %v1046 = vsel %vm1013, %v996, %v1030
      %v1047 = vsel %vm1014, %v997, %v1031
      %p1048 = scmp.eq.s32.totalorder %s31, 0
      // Predicated region
      $region77: #{tpu_custom_call.1} parent=75 // pred_check
        %p1049 = pneg %p1048
      $region78: #{tpu_custom_call.1} parent=75 // pred_check_branch
        %1051 = sbr.rel (%p1049) target = $region80
      $region79: #{tpu_custom_call.1} parent=75 // pred_region
        %vm1052 = vcmask 125952
        %1053 = vst.msk [vmem:[#allocation2] sm:$0xf] %vm1052, 0.0
      $region80: #{tpu_custom_call.1} parent=75 // pred_fallthru
        _
      %v1054 = vld [vmem:[#allocation2] sm:$0xf]
      %vm1071 = vcmask 1043456
      %v1072 = vrot.slane %v1032, 4
      %v1073 = vrot.slane %v1033, 4
      %v1074 = vsel %vm1071, %v1072, %v1073
      %v1075 = vrot.slane %v1034, 4
      %v1076 = vsel %vm1071, %v1073, %v1075
      %v1077 = vrot.slane %v1035, 4
      %v1078 = vsel %vm1071, %v1075, %v1077
      %v1079 = vrot.slane %v1036, 4
      %v1080 = vsel %vm1071, %v1077, %v1079
      %v1081 = vrot.slane %v1037, 4
      %v1082 = vsel %vm1071, %v1079, %v1081
      %v1083 = vrot.slane %v1038, 4
      %v1084 = vsel %vm1071, %v1081, %v1083
      %v1085 = vrot.slane %v1039, 4
      %v1086 = vsel %vm1071, %v1083, %v1085
      %v1087 = vrot.slane %v1040, 4
      %v1088 = vsel %vm1071, %v1085, %v1087
      %v1089 = vrot.slane %v1041, 4
      %v1090 = vsel %vm1071, %v1087, %v1089
      %v1091 = vrot.slane %v1042, 4
      %v1092 = vsel %vm1071, %v1089, %v1091
      %v1093 = vrot.slane %v1043, 4
      %v1094 = vsel %vm1071, %v1091, %v1093
      %v1095 = vrot.slane %v1044, 4
      %v1096 = vsel %vm1071, %v1093, %v1095
      %v1097 = vrot.slane %v1045, 4
      %v1098 = vsel %vm1071, %v1095, %v1097
      %v1099 = vrot.slane %v1046, 4
      %v1100 = vsel %vm1071, %v1097, %v1099
      %v1101 = vrot.slane %v1047, 4
      %v1102 = vsel %vm1071, %v1099, %v1101
      %v1120 = vsel %vm1071, %v1054, %v1072
      %vm1121 = vcmask 125952
      %1122 = vst.msk [vmem:[#allocation2] sm:$0xf] %vm1121, %v1101
      %vm1124 = vcmask 1045504
      %v1125 = vrot.slane %v1120, 2
      %v1126 = vrot.slane %v1074, 2
      %v1127 = vsel %vm1124, %v1125, %v1126
      %v1128 = vrot.slane %v1076, 2
      %v1129 = vsel %vm1124, %v1126, %v1128
      %v1130 = vrot.slane %v1078, 2
      %v1131 = vsel %vm1124, %v1128, %v1130
      %v1132 = vrot.slane %v1080, 2
      %v1133 = vsel %vm1124, %v1130, %v1132
      %v1134 = vrot.slane %v1082, 2
      %v1135 = vsel %vm1124, %v1132, %v1134
      %v1136 = vrot.slane %v1084, 2
      %v1137 = vsel %vm1124, %v1134, %v1136
      %v1138 = vrot.slane %v1086, 2
      %v1139 = vsel %vm1124, %v1136, %v1138
      %v1140 = vrot.slane %v1088, 2
      %v1141 = vsel %vm1124, %v1138, %v1140
      %v1142 = vrot.slane %v1090, 2
      %v1143 = vsel %vm1124, %v1140, %v1142
      %v1144 = vrot.slane %v1092, 2
      %v1145 = vsel %vm1124, %v1142, %v1144
      %v1146 = vrot.slane %v1094, 2
      %v1147 = vsel %vm1124, %v1144, %v1146
      %v1148 = vrot.slane %v1096, 2
      %v1149 = vsel %vm1124, %v1146, %v1148
      %v1150 = vrot.slane %v1098, 2
      %v1151 = vsel %vm1124, %v1148, %v1150
      %v1152 = vrot.slane %v1100, 2
      %v1153 = vsel %vm1124, %v1150, %v1152
      %v1154 = vrot.slane %v1102, 2
      %v1155 = vsel %vm1124, %v1152, %v1154
      %v1156 = vrot.slane %v1101, 2
      %v1157 = vsel %vm1124, %v1154, %v1156
      %1158 = vrot.lane.b32.xlu0 %v1127, 16
      %v1159 = vpop.permute.xlu0 %1158
      %1160 = vrot.lane.b32.xlu0 %v1129, 16
      %v1161 = vpop.permute.xlu0 %1160
      %1162 = vrot.lane.b32.xlu0 %v1131, 16
      %v1163 = vpop.permute.xlu0 %1162
      %1164 = vrot.lane.b32.xlu0 %v1133, 16
      %v1165 = vpop.permute.xlu0 %1164
      %1166 = vrot.lane.b32.xlu0 %v1135, 16
      %v1167 = vpop.permute.xlu0 %1166
      %1168 = vrot.lane.b32.xlu0 %v1137, 16
      %v1169 = vpop.permute.xlu0 %1168
      %1170 = vrot.lane.b32.xlu0 %v1139, 16
      %v1171 = vpop.permute.xlu0 %1170
      %1172 = vrot.lane.b32.xlu0 %v1141, 16
      %v1173 = vpop.permute.xlu0 %1172
      %1174 = vrot.lane.b32.xlu0 %v1143, 16
      %v1175 = vpop.permute.xlu0 %1174
      %1176 = vrot.lane.b32.xlu0 %v1145, 16
      %v1177 = vpop.permute.xlu0 %1176
      %1178 = vrot.lane.b32.xlu0 %v1147, 16
      %v1179 = vpop.permute.xlu0 %1178
      %1180 = vrot.lane.b32.xlu0 %v1149, 16
      %v1181 = vpop.permute.xlu0 %1180
      %1182 = vrot.lane.b32.xlu0 %v1151, 16
      %v1183 = vpop.permute.xlu0 %1182
      %1184 = vrot.lane.b32.xlu0 %v1153, 16
      %v1185 = vpop.permute.xlu0 %1184
      %1186 = vrot.lane.b32.xlu0 %v1155, 16
      %v1187 = vpop.permute.xlu0 %1186
      %1188 = vrot.lane.b32.xlu0 %v1157, 16
      %v1189 = vpop.permute.xlu0 %1188
      %v1206 = vrot.slane %v1120, 4
      %v1207 = vrot.slane %v1074, 4
      %v1208 = vsel %vm1071, %v1206, %v1207
      %v1209 = vrot.slane %v1076, 4
      %v1210 = vsel %vm1071, %v1207, %v1209
      %v1211 = vrot.slane %v1078, 4
      %v1212 = vsel %vm1071, %v1209, %v1211
      %v1213 = vrot.slane %v1080, 4
      %v1214 = vsel %vm1071, %v1211, %v1213
      %v1215 = vrot.slane %v1082, 4
      %v1216 = vsel %vm1071, %v1213, %v1215
      %v1217 = vrot.slane %v1084, 4
      %v1218 = vsel %vm1071, %v1215, %v1217
      %v1219 = vrot.slane %v1086, 4
      %v1220 = vsel %vm1071, %v1217, %v1219
      %v1221 = vrot.slane %v1088, 4
      %v1222 = vsel %vm1071, %v1219, %v1221
      %v1223 = vrot.slane %v1090, 4
      %v1224 = vsel %vm1071, %v1221, %v1223
      %v1225 = vrot.slane %v1092, 4
      %v1226 = vsel %vm1071, %v1223, %v1225
      %v1227 = vrot.slane %v1094, 4
      %v1228 = vsel %vm1071, %v1225, %v1227
      %v1229 = vrot.slane %v1096, 4
      %v1230 = vsel %vm1071, %v1227, %v1229
      %v1231 = vrot.slane %v1098, 4
      %v1232 = vsel %vm1071, %v1229, %v1231
      %v1233 = vrot.slane %v1100, 4
      %v1234 = vsel %vm1071, %v1231, %v1233
      %v1235 = vrot.slane %v1102, 4
      %v1236 = vsel %vm1071, %v1233, %v1235
      %v1237 = vrot.slane %v1101, 4
      %v1238 = vsel %vm1071, %v1235, %v1237
      %1239 = vrot.lane.b32.xlu0 %v1208, 32
      %v1240 = vpop.permute.xlu0 %1239
      %1241 = vrot.lane.b32.xlu0 %v1210, 32
      %v1242 = vpop.permute.xlu0 %1241
      %1243 = vrot.lane.b32.xlu0 %v1212, 32
      %v1244 = vpop.permute.xlu0 %1243
      %1245 = vrot.lane.b32.xlu0 %v1214, 32
      %v1246 = vpop.permute.xlu0 %1245
      %1247 = vrot.lane.b32.xlu0 %v1216, 32
      %v1248 = vpop.permute.xlu0 %1247
      %1249 = vrot.lane.b32.xlu0 %v1218, 32
      %v1250 = vpop.permute.xlu0 %1249
      %1251 = vrot.lane.b32.xlu0 %v1220, 32
      %v1252 = vpop.permute.xlu0 %1251
      %1253 = vrot.lane.b32.xlu0 %v1222, 32
      %v1254 = vpop.permute.xlu0 %1253
      %1255 = vrot.lane.b32.xlu0 %v1224, 32
      %v1256 = vpop.permute.xlu0 %1255
      %1257 = vrot.lane.b32.xlu0 %v1226, 32
      %v1258 = vpop.permute.xlu0 %1257
      %1259 = vrot.lane.b32.xlu0 %v1228, 32
      %v1260 = vpop.permute.xlu0 %1259
      %1261 = vrot.lane.b32.xlu0 %v1230, 32
      %v1262 = vpop.permute.xlu0 %1261
      %1263 = vrot.lane.b32.xlu0 %v1232, 32
      %v1264 = vpop.permute.xlu0 %1263
      %1265 = vrot.lane.b32.xlu0 %v1234, 32
      %v1266 = vpop.permute.xlu0 %1265
      %1267 = vrot.lane.b32.xlu0 %v1236, 32
      %v1268 = vpop.permute.xlu0 %1267
      %1269 = vrot.lane.b32.xlu0 %v1238, 32
      %v1270 = vpop.permute.xlu0 %1269
      %v1287 = vsel %vm744, %v1120, %v1159
      %v1288 = vsel %vm744, %v1074, %v1161
      %v1289 = vsel %vm744, %v1076, %v1163
      %v1290 = vsel %vm744, %v1078, %v1165
      %v1291 = vsel %vm744, %v1080, %v1167
      %v1292 = vsel %vm744, %v1082, %v1169
      %v1293 = vsel %vm744, %v1084, %v1171
      %v1294 = vsel %vm744, %v1086, %v1173
      %v1295 = vsel %vm744, %v1088, %v1175
      %v1296 = vsel %vm744, %v1090, %v1177
      %v1297 = vsel %vm744, %v1092, %v1179
      %v1298 = vsel %vm744, %v1094, %v1181
      %v1299 = vsel %vm744, %v1096, %v1183
      %v1300 = vsel %vm744, %v1098, %v1185
      %v1301 = vsel %vm744, %v1100, %v1187
      %v1302 = vsel %vm744, %v1102, %v1189
      %vm1303 = vcmask 261120
      %v1304 = vsel %vm1303, %v1287, %v1240
      %v1305 = vsel %vm1303, %v1288, %v1242
      %v1306 = vsel %vm1303, %v1289, %v1244
      %v1307 = vsel %vm1303, %v1290, %v1246
      %v1308 = vsel %vm1303, %v1291, %v1248
      %v1309 = vsel %vm1303, %v1292, %v1250
      %v1310 = vsel %vm1303, %v1293, %v1252
      %v1311 = vsel %vm1303, %v1294, %v1254
      %v1312 = vsel %vm1303, %v1295, %v1256
      %v1313 = vsel %vm1303, %v1296, %v1258
      %v1314 = vsel %vm1303, %v1297, %v1260
      %v1315 = vsel %vm1303, %v1298, %v1262
      %v1316 = vsel %vm1303, %v1299, %v1264
      %v1317 = vsel %vm1303, %v1300, %v1266
      %v1318 = vsel %vm1303, %v1301, %v1268
      %v1319 = vsel %vm1303, %v1302, %v1270
      %v1320 = vld [vmem:[%s6] sm:$0xff]
      %v1321 = vld [vmem:[%s6 + $0x8] sm:$0xff]
      %v1322 = vld [vmem:[%s6 + $0x10] sm:$0xff]
      %v1323 = vld [vmem:[%s6 + $0x18] sm:$0xff]
      %v1324 = vld [vmem:[%s6 + $0x20] sm:$0xff]
      %v1325 = vld [vmem:[%s6 + $0x28] sm:$0xff]
      %v1326 = vld [vmem:[%s7] sm:$0x1]
      %v1328 = vlaneseq
      %v1329 = vshrl.u32 %v1328, 7
      %v1330 = vsub.s32 0, %v1329
      %v1331 = vrot.slane %v1326, %v1330
      %vm1333 = vcmask 392192
      %v1335 = vsel %vm1333, %v1304, 0
      %v1338 = vsel %vm1333, %v1305, 0
      %v1341 = vsel %vm1333, %v1306, 0
      %v1344 = vsel %vm1333, %v1307, 0
      %v1347 = vsel %vm1333, %v1308, 0
      %v1350 = vsel %vm1333, %v1309, 0
      %v1353 = vsel %vm1333, %v1310, 0
      %v1356 = vsel %vm1333, %v1311, 0
      %v1359 = vsel %vm1333, %v1312, 0
      %v1362 = vsel %vm1333, %v1313, 0
      %v1365 = vsel %vm1333, %v1314, 0
      %v1368 = vsel %vm1333, %v1315, 0
      %v1371 = vsel %vm1333, %v1316, 0
      %v1374 = vsel %vm1333, %v1317, 0
      %v1377 = vsel %vm1333, %v1318, 0
      %v1380 = vsel %vm1333, %v1319, 0
      %1382 = vmatprep.subr.mxu0 0.0
      %1383 = vmatpush1.msra.mxu0 0.0
      %1384 = vmatprep.subr.mxu0 0.0
      %1385 = vmatpush1.msra.mxu0 0.0
      %1386 = vmatprep.subr.mxu0 0.0
      %1387 = vmatpush1.msra.mxu0 0.0
      %1388 = vmatprep.subr.mxu0 0.0
      %1389 = vmatpush1.msra.mxu0 0.0
      %1390 = vmatprep.subr.mxu0 0.0
      %1391 = vmatpush1.msra.mxu0 0.0
      %1392 = vmatprep.subr.mxu0 0.0
      %1393 = vmatpush1.msra.mxu0 0.0
      %1394 = vmatprep.subr.mxu0 0.0
      %1395 = vmatpush1.msra.mxu0 0.0
      %1396 = vmatprep.subr.mxu0 0.0
      %1397 = vmatpush1.msra.mxu0 0.0
      %1398 = vmatprep.subr.mxu0 0.0
      %1399 = vmatpush1.msra.mxu0 0.0
      %1400 = vmatprep.subr.mxu0 0.0
      %1401 = vmatpush1.msra.mxu0 0.0
      %1402 = vmatprep.subr.mxu0 0.0
      %1403 = vmatpush1.msra.mxu0 %v1325
      %1404 = vmatprep.subr.mxu0 0.0
      %1405 = vmatpush1.msra.mxu0 %v1324
      %1406 = vmatprep.subr.mxu0 0.0
      %1407 = vmatpush1.msra.mxu0 %v1323
      %1408 = vmatprep.subr.mxu0 0.0
      %1409 = vmatpush1.msra.mxu0 %v1322
      %1410 = vmatprep.subr.mxu0 0.0
      %1411 = vmatpush1.msra.mxu0 %v1321
      %1412 = vmatprep.subr.mxu0 0.0
      %1413 = vmatpush1.msra.mxu0 %v1320
      %1414 = vmatprep.subr.mxu0 0.0
      %1415 = vmatpush2.msra.mxu0 0.0
      %1416 = vmatprep.subr.mxu0 0.0
      %1417 = vmatpush2.msra.mxu0 0.0
      %1418 = vmatprep.subr.mxu0 0.0
      %1419 = vmatpush2.msra.mxu0 0.0
      %1420 = vmatprep.subr.mxu0 0.0
      %1421 = vmatpush2.msra.mxu0 0.0
      %1422 = vmatprep.subr.mxu0 0.0
      %1423 = vmatpush2.msra.mxu0 0.0
      %1424 = vmatprep.subr.mxu0 0.0
      %1425 = vmatpush2.msra.mxu0 0.0
      %1426 = vmatprep.subr.mxu0 0.0
      %1427 = vmatpush2.msra.mxu0 0.0
      %1428 = vmatprep.subr.mxu0 0.0
      %1429 = vmatpush2.msra.mxu0 0.0
      %1430 = vmatprep.subr.mxu0 0.0
      %1431 = vmatpush2.msra.mxu0 0.0
      %1432 = vmatprep.subr.mxu0 0.0
      %1433 = vmatpush2.msra.mxu0 0.0
      %1434 = vmatprep.subr.mxu0 0.0
      %1435 = vmatpush2.msra.mxu0 0.0
      %1436 = vmatprep.subr.mxu0 0.0
      %1437 = vmatpush2.msra.mxu0 0.0
      %1438 = vmatprep.subr.mxu0 0.0
      %1439 = vmatpush2.msra.mxu0 0.0
      %1440 = vmatprep.subr.mxu0 0.0
      %1441 = vmatpush2.msra.mxu0 0.0
      %1442 = vmatprep.subr.mxu0 0.0
      %1443 = vmatpush2.msra.mxu0 0.0
      %1444 = vmatprep.subr.mxu0 0.0
      %1445 = vmatpush2.msra.mxu0 0.0
      %1446 = vmatprep.mubr.f32.mxu0 0.0
      %1447 = vmatmul.mubr.f32.gmra.mxu0 %v1335
      %v1448 = vpop.f32.mrf.mxu0
      %v1449 = vadd.f32 %v1331, %v1448
      %v1450 = vpop.f32.mrf.mxu0
      %1451 = vmatprep.mubr.f32.mxu0 0.0
      %1452 = vmatmul.mubr.f32.gmra.mxu0 %v1338
      %v1453 = vpop.f32.mrf.mxu0
      %v1454 = vadd.f32 %v1331, %v1453
      %v1455 = vpop.f32.mrf.mxu0
      %1456 = vmatprep.mubr.f32.mxu0 0.0
      %1457 = vmatmul.mubr.f32.gmra.mxu0 %v1341
      %v1458 = vpop.f32.mrf.mxu0
      %v1459 = vadd.f32 %v1331, %v1458
      %v1460 = vpop.f32.mrf.mxu0
      %1461 = vmatprep.mubr.f32.mxu0 0.0
      %1462 = vmatmul.mubr.f32.gmra.mxu0 %v1344
      %v1463 = vpop.f32.mrf.mxu0
      %v1464 = vadd.f32 %v1331, %v1463
      %v1465 = vpop.f32.mrf.mxu0
      %1466 = vmatprep.mubr.f32.mxu0 0.0
      %1467 = vmatmul.mubr.f32.gmra.mxu0 %v1347
      %v1468 = vpop.f32.mrf.mxu0
      %v1469 = vadd.f32 %v1331, %v1468
      %v1470 = vpop.f32.mrf.mxu0
      %1471 = vmatprep.mubr.f32.mxu0 0.0
      %1472 = vmatmul.mubr.f32.gmra.mxu0 %v1350
      %v1473 = vpop.f32.mrf.mxu0
      %v1474 = vadd.f32 %v1331, %v1473
      %v1475 = vpop.f32.mrf.mxu0
      %1476 = vmatprep.mubr.f32.mxu0 0.0
      %1477 = vmatmul.mubr.f32.gmra.mxu0 %v1353
      %v1478 = vpop.f32.mrf.mxu0
      %v1479 = vadd.f32 %v1331, %v1478
      %v1480 = vpop.f32.mrf.mxu0
      %1481 = vmatprep.mubr.f32.mxu0 0.0
      %1482 = vmatmul.mubr.f32.gmra.mxu0 %v1356
      %v1483 = vpop.f32.mrf.mxu0
      %v1484 = vadd.f32 %v1331, %v1483
      %v1485 = vpop.f32.mrf.mxu0
      %1486 = vmatprep.mubr.f32.mxu0 0.0
      %1487 = vmatmul.mubr.f32.gmra.mxu0 %v1359
      %v1488 = vpop.f32.mrf.mxu0
      %v1489 = vadd.f32 %v1331, %v1488
      %v1490 = vpop.f32.mrf.mxu0
      %1491 = vmatprep.mubr.f32.mxu0 0.0
      %1492 = vmatmul.mubr.f32.gmra.mxu0 %v1362
      %v1493 = vpop.f32.mrf.mxu0
      %v1494 = vadd.f32 %v1331, %v1493
      %v1495 = vpop.f32.mrf.mxu0
      %1496 = vmatprep.mubr.f32.mxu0 0.0
      %1497 = vmatmul.mubr.f32.gmra.mxu0 %v1365
      %v1498 = vpop.f32.mrf.mxu0
      %v1499 = vadd.f32 %v1331, %v1498
      %v1500 = vpop.f32.mrf.mxu0
      %1501 = vmatprep.mubr.f32.mxu0 0.0
      %1502 = vmatmul.mubr.f32.gmra.mxu0 %v1368
      %v1503 = vpop.f32.mrf.mxu0
      %v1504 = vadd.f32 %v1331, %v1503
      %v1505 = vpop.f32.mrf.mxu0
      %1506 = vmatprep.mubr.f32.mxu0 0.0
      %1507 = vmatmul.mubr.f32.gmra.mxu0 %v1371
      %v1508 = vpop.f32.mrf.mxu0
      %v1509 = vadd.f32 %v1331, %v1508
      %v1510 = vpop.f32.mrf.mxu0
      %1511 = vmatprep.mubr.f32.mxu0 0.0
      %1512 = vmatmul.mubr.f32.gmra.mxu0 %v1374
      %v1513 = vpop.f32.mrf.mxu0
      %v1514 = vadd.f32 %v1331, %v1513
      %v1515 = vpop.f32.mrf.mxu0
      %1516 = vmatprep.mubr.f32.mxu0 0.0
      %1517 = vmatmul.mubr.f32.gmra.mxu0 %v1377
      %v1518 = vpop.f32.mrf.mxu0
      %v1519 = vadd.f32 %v1331, %v1518
      %v1520 = vpop.f32.mrf.mxu0
      %1521 = vmatprep.mubr.f32.mxu0 0.0
      %1522 = vmatmul.mubr.f32.gmra.mxu0 %v1380
      %v1523 = vpop.f32.mrf.mxu0
      %v1524 = vadd.f32 %v1331, %v1523
      %v1525 = vpop.f32.mrf.mxu0
      %1526 = vdwg.mxu0
      %v1527 = vld [vmem:[%s8] sm:$0x1]
      %v1528 = vld [vmem:[%s9] sm:$0x1]
      %v1529 = vsel %vm744, %v1449, 0.0
      %1530 = vadd.xlane.f32.xlu0 %v1529
      %v1531 = vpop.xlane.xlu0 %1530
      %v1532 = vsel %vm744, %v1454, 0.0
      %1533 = vadd.xlane.f32.xlu0 %v1532
      %v1534 = vpop.xlane.xlu0 %1533
      %v1535 = vsel %vm744, %v1459, 0.0
      %1536 = vadd.xlane.f32.xlu0 %v1535
      %v1537 = vpop.xlane.xlu0 %1536
      %v1538 = vsel %vm744, %v1464, 0.0
      %1539 = vadd.xlane.f32.xlu0 %v1538
      %v1540 = vpop.xlane.xlu0 %1539
      %v1541 = vsel %vm744, %v1469, 0.0
      %1542 = vadd.xlane.f32.xlu0 %v1541
      %v1543 = vpop.xlane.xlu0 %1542
      %v1544 = vsel %vm744, %v1474, 0.0
      %1545 = vadd.xlane.f32.xlu0 %v1544
      %v1546 = vpop.xlane.xlu0 %1545
      %v1547 = vsel %vm744, %v1479, 0.0
      %1548 = vadd.xlane.f32.xlu0 %v1547
      %v1549 = vpop.xlane.xlu0 %1548
      %v1550 = vsel %vm744, %v1484, 0.0
      %1551 = vadd.xlane.f32.xlu0 %v1550
      %v1552 = vpop.xlane.xlu0 %1551
      %v1553 = vsel %vm744, %v1489, 0.0
      %1554 = vadd.xlane.f32.xlu0 %v1553
      %v1555 = vpop.xlane.xlu0 %1554
      %v1556 = vsel %vm744, %v1494, 0.0
      %1557 = vadd.xlane.f32.xlu0 %v1556
      %v1558 = vpop.xlane.xlu0 %1557
      %v1559 = vsel %vm744, %v1499, 0.0
      %1560 = vadd.xlane.f32.xlu0 %v1559
      %v1561 = vpop.xlane.xlu0 %1560
      %v1562 = vsel %vm744, %v1504, 0.0
      %1563 = vadd.xlane.f32.xlu0 %v1562
      %v1564 = vpop.xlane.xlu0 %1563
      %v1565 = vsel %vm744, %v1509, 0.0
      %1566 = vadd.xlane.f32.xlu0 %v1565
      %v1567 = vpop.xlane.xlu0 %1566
      %v1568 = vsel %vm744, %v1514, 0.0
      %1569 = vadd.xlane.f32.xlu0 %v1568
      %v1570 = vpop.xlane.xlu0 %1569
      %v1571 = vsel %vm744, %v1519, 0.0
      %1572 = vadd.xlane.f32.xlu0 %v1571
      %v1573 = vpop.xlane.xlu0 %1572
      %v1574 = vsel %vm744, %v1524, 0.0
      %1575 = vadd.xlane.f32.xlu0 %v1574
      %v1576 = vpop.xlane.xlu0 %1575
      %v1577 = vmul.f32 %v1531, %v793
      %v1578 = vmul.f32 %v1534, %v793
      %v1579 = vmul.f32 %v1537, %v793
      %v1580 = vmul.f32 %v1540, %v793
      %v1581 = vmul.f32 %v1543, %v793
      %v1582 = vmul.f32 %v1546, %v793
      %v1583 = vmul.f32 %v1549, %v793
      %v1584 = vmul.f32 %v1552, %v793
      %v1585 = vmul.f32 %v1555, %v793
      %v1586 = vmul.f32 %v1558, %v793
      %v1587 = vmul.f32 %v1561, %v793
      %v1588 = vmul.f32 %v1564, %v793
      %v1589 = vmul.f32 %v1567, %v793
      %v1590 = vmul.f32 %v1570, %v793
      %v1591 = vmul.f32 %v1573, %v793
      %v1592 = vmul.f32 %v1576, %v793
      %v1593 = vsub.f32 %v1449, %v1577
      %v1594 = vsub.f32 %v1454, %v1578
      %v1595 = vsub.f32 %v1459, %v1579
      %v1596 = vsub.f32 %v1464, %v1580
      %v1597 = vsub.f32 %v1469, %v1581
      %v1598 = vsub.f32 %v1474, %v1582
      %v1599 = vsub.f32 %v1479, %v1583
      %v1600 = vsub.f32 %v1484, %v1584
      %v1601 = vsub.f32 %v1489, %v1585
      %v1602 = vsub.f32 %v1494, %v1586
      %v1603 = vsub.f32 %v1499, %v1587
      %v1604 = vsub.f32 %v1504, %v1588
      %v1605 = vsub.f32 %v1509, %v1589
      %v1606 = vsub.f32 %v1514, %v1590
      %v1607 = vsub.f32 %v1519, %v1591
      %v1608 = vsub.f32 %v1524, %v1592
      %v1609 = vmul.f32 %v1593, %v1593
      %v1610 = vmul.f32 %v1594, %v1594
      %v1611 = vmul.f32 %v1595, %v1595
      %v1612 = vmul.f32 %v1596, %v1596
      %v1613 = vmul.f32 %v1597, %v1597
      %v1614 = vmul.f32 %v1598, %v1598
      %v1615 = vmul.f32 %v1599, %v1599
      %v1616 = vmul.f32 %v1600, %v1600
      %v1617 = vmul.f32 %v1601, %v1601
      %v1618 = vmul.f32 %v1602, %v1602
      %v1619 = vmul.f32 %v1603, %v1603
      %v1620 = vmul.f32 %v1604, %v1604
      %v1621 = vmul.f32 %v1605, %v1605
      %v1622 = vmul.f32 %v1606, %v1606
      %v1623 = vmul.f32 %v1607, %v1607
      %v1624 = vmul.f32 %v1608, %v1608
      %v1625 = vsel %vm744, %v1609, 0.0
      %1626 = vadd.xlane.f32.xlu0 %v1625
      %v1627 = vpop.xlane.xlu0 %1626
      %v1628 = vsel %vm744, %v1610, 0.0
      %1629 = vadd.xlane.f32.xlu0 %v1628
      %v1630 = vpop.xlane.xlu0 %1629
      %v1631 = vsel %vm744, %v1611, 0.0
      %1632 = vadd.xlane.f32.xlu0 %v1631
      %v1633 = vpop.xlane.xlu0 %1632
      %v1634 = vsel %vm744, %v1612, 0.0
      %1635 = vadd.xlane.f32.xlu0 %v1634
      %v1636 = vpop.xlane.xlu0 %1635
      %v1637 = vsel %vm744, %v1613, 0.0
      %1638 = vadd.xlane.f32.xlu0 %v1637
      %v1639 = vpop.xlane.xlu0 %1638
      %v1640 = vsel %vm744, %v1614, 0.0
      %1641 = vadd.xlane.f32.xlu0 %v1640
      %v1642 = vpop.xlane.xlu0 %1641
      %v1643 = vsel %vm744, %v1615, 0.0
      %1644 = vadd.xlane.f32.xlu0 %v1643
      %v1645 = vpop.xlane.xlu0 %1644
      %v1646 = vsel %vm744, %v1616, 0.0
      %1647 = vadd.xlane.f32.xlu0 %v1646
      %v1648 = vpop.xlane.xlu0 %1647
      %v1649 = vsel %vm744, %v1617, 0.0
      %1650 = vadd.xlane.f32.xlu0 %v1649
      %v1651 = vpop.xlane.xlu0 %1650
      %v1652 = vsel %vm744, %v1618, 0.0
      %1653 = vadd.xlane.f32.xlu0 %v1652
      %v1654 = vpop.xlane.xlu0 %1653
      %v1655 = vsel %vm744, %v1619, 0.0
      %1656 = vadd.xlane.f32.xlu0 %v1655
      %v1657 = vpop.xlane.xlu0 %1656
      %v1658 = vsel %vm744, %v1620, 0.0
      %1659 = vadd.xlane.f32.xlu0 %v1658
      %v1660 = vpop.xlane.xlu0 %1659
      %v1661 = vsel %vm744, %v1621, 0.0
      %1662 = vadd.xlane.f32.xlu0 %v1661
      %v1663 = vpop.xlane.xlu0 %1662
      %v1664 = vsel %vm744, %v1622, 0.0
      %1665 = vadd.xlane.f32.xlu0 %v1664
      %v1666 = vpop.xlane.xlu0 %1665
      %v1667 = vsel %vm744, %v1623, 0.0
      %1668 = vadd.xlane.f32.xlu0 %v1667
      %v1669 = vpop.xlane.xlu0 %1668
      %v1670 = vsel %vm744, %v1624, 0.0
      %1671 = vadd.xlane.f32.xlu0 %v1670
      %v1672 = vpop.xlane.xlu0 %1671
      %v1673 = vmul.f32 %v1627, %v793
      %v1674 = vmul.f32 %v1630, %v793
      %v1675 = vmul.f32 %v1633, %v793
      %v1676 = vmul.f32 %v1636, %v793
      %v1677 = vmul.f32 %v1639, %v793
      %v1678 = vmul.f32 %v1642, %v793
      %v1679 = vmul.f32 %v1645, %v793
      %v1680 = vmul.f32 %v1648, %v793
      %v1681 = vmul.f32 %v1651, %v793
      %v1682 = vmul.f32 %v1654, %v793
      %v1683 = vmul.f32 %v1657, %v793
      %v1684 = vmul.f32 %v1660, %v793
      %v1685 = vmul.f32 %v1663, %v793
      %v1686 = vmul.f32 %v1666, %v793
      %v1687 = vmul.f32 %v1669, %v793
      %v1688 = vmul.f32 %v1672, %v793
      %v1689 = vadd.f32 %v1673, 1e-05
      %v1690 = vadd.f32 %v1674, 1e-05
      %v1691 = vadd.f32 %v1675, 1e-05
      %v1692 = vadd.f32 %v1676, 1e-05
      %v1693 = vadd.f32 %v1677, 1e-05
      %v1694 = vadd.f32 %v1678, 1e-05
      %v1695 = vadd.f32 %v1679, 1e-05
      %v1696 = vadd.f32 %v1680, 1e-05
      %v1697 = vadd.f32 %v1681, 1e-05
      %v1698 = vadd.f32 %v1682, 1e-05
      %v1699 = vadd.f32 %v1683, 1e-05
      %v1700 = vadd.f32 %v1684, 1e-05
      %v1701 = vadd.f32 %v1685, 1e-05
      %v1702 = vadd.f32 %v1686, 1e-05
      %v1703 = vadd.f32 %v1687, 1e-05
      %v1704 = vadd.f32 %v1688, 1e-05
      %v1705 = vrsqrt.pop %v1689
      %v1706 = vrsqrt.pop %v1690
      %v1707 = vrsqrt.pop %v1691
      %v1708 = vrsqrt.pop %v1692
      %v1709 = vrsqrt.pop %v1693
      %v1710 = vrsqrt.pop %v1694
      %v1711 = vrsqrt.pop %v1695
      %v1712 = vrsqrt.pop %v1696
      %v1713 = vrsqrt.pop %v1697
      %v1714 = vrsqrt.pop %v1698
      %v1715 = vrsqrt.pop %v1699
      %v1716 = vrsqrt.pop %v1700
      %v1717 = vrsqrt.pop %v1701
      %v1718 = vrsqrt.pop %v1702
      %v1719 = vrsqrt.pop %v1703
      %v1720 = vrsqrt.pop %v1704
      %v1721 = vmul.f32 %v1593, %v1705
      %v1722 = vmul.f32 %v1594, %v1706
      %v1723 = vmul.f32 %v1595, %v1707
      %v1724 = vmul.f32 %v1596, %v1708
      %v1725 = vmul.f32 %v1597, %v1709
      %v1726 = vmul.f32 %v1598, %v1710
      %v1727 = vmul.f32 %v1599, %v1711
      %v1728 = vmul.f32 %v1600, %v1712
      %v1729 = vmul.f32 %v1601, %v1713
      %v1730 = vmul.f32 %v1602, %v1714
      %v1731 = vmul.f32 %v1603, %v1715
      %v1732 = vmul.f32 %v1604, %v1716
      %v1733 = vmul.f32 %v1605, %v1717
      %v1734 = vmul.f32 %v1606, %v1718
      %v1735 = vmul.f32 %v1607, %v1719
      %v1736 = vmul.f32 %v1608, %v1720
      %v1738 = vlaneseq
      %v1739 = vshrl.u32 %v1738, 7
      %v1740 = vsub.s32 0, %v1739
      %v1741 = vrot.slane %v1527, %v1740
      %v1743 = vmul.f32 %v1721, %v1741
      %v1744 = vmul.f32 %v1722, %v1741
      %v1745 = vmul.f32 %v1723, %v1741
      %v1746 = vmul.f32 %v1724, %v1741
      %v1747 = vmul.f32 %v1725, %v1741
      %v1748 = vmul.f32 %v1726, %v1741
      %v1749 = vmul.f32 %v1727, %v1741
      %v1750 = vmul.f32 %v1728, %v1741
      %v1751 = vmul.f32 %v1729, %v1741
      %v1752 = vmul.f32 %v1730, %v1741
      %v1753 = vmul.f32 %v1731, %v1741
      %v1754 = vmul.f32 %v1732, %v1741
      %v1755 = vmul.f32 %v1733, %v1741
      %v1756 = vmul.f32 %v1734, %v1741
      %v1757 = vmul.f32 %v1735, %v1741
      %v1758 = vmul.f32 %v1736, %v1741
      %v1760 = vlaneseq
      %v1761 = vshrl.u32 %v1760, 7
      %v1762 = vsub.s32 0, %v1761
      %v1763 = vrot.slane %v1528, %v1762
      %v1765 = vadd.f32 %v1743, %v1763
      %v1766 = vadd.f32 %v1744, %v1763
      %v1767 = vadd.f32 %v1745, %v1763
      %v1768 = vadd.f32 %v1746, %v1763
      %v1769 = vadd.f32 %v1747, %v1763
      %v1770 = vadd.f32 %v1748, %v1763
      %v1771 = vadd.f32 %v1749, %v1763
      %v1772 = vadd.f32 %v1750, %v1763
      %v1773 = vadd.f32 %v1751, %v1763
      %v1774 = vadd.f32 %v1752, %v1763
      %v1775 = vadd.f32 %v1753, %v1763
      %v1776 = vadd.f32 %v1754, %v1763
      %v1777 = vadd.f32 %v1755, %v1763
      %v1778 = vadd.f32 %v1756, %v1763
      %v1779 = vadd.f32 %v1757, %v1763
      %v1780 = vadd.f32 %v1758, %v1763
      %v1781 = vtanh.pop %v1765
      %v1782 = vtanh.pop %v1766
      %v1783 = vtanh.pop %v1767
      %v1784 = vtanh.pop %v1768
      %v1785 = vtanh.pop %v1769
      %v1786 = vtanh.pop %v1770
      %v1787 = vtanh.pop %v1771
      %v1788 = vtanh.pop %v1772
      %v1789 = vtanh.pop %v1773
      %v1790 = vtanh.pop %v1774
      %v1791 = vtanh.pop %v1775
      %v1792 = vtanh.pop %v1776
      %v1793 = vtanh.pop %v1777
      %v1794 = vtanh.pop %v1778
      %v1795 = vtanh.pop %v1779
      %v1796 = vtanh.pop %v1780
      %v1797 = vld [vmem:[%s10] sm:$0xff]
      %v1798 = vld [vmem:[%s10 + $0x8] sm:$0xff]
      %v1799 = vld [vmem:[%s11] sm:$0x1]
      %v1801 = vlaneseq
      %v1802 = vshrl.u32 %v1801, 7
      %v1803 = vsub.s32 0, %v1802
      %v1804 = vrot.slane %v1799, %v1803
      %v1807 = vsel %vm744, %v1781, 0
      %v1810 = vsel %vm744, %v1782, 0
      %v1813 = vsel %vm744, %v1783, 0
      %v1816 = vsel %vm744, %v1784, 0
      %v1819 = vsel %vm744, %v1785, 0
      %v1822 = vsel %vm744, %v1786, 0
      %v1825 = vsel %vm744, %v1787, 0
      %v1828 = vsel %vm744, %v1788, 0
      %v1831 = vsel %vm744, %v1789, 0
      %v1834 = vsel %vm744, %v1790, 0
      %v1837 = vsel %vm744, %v1791, 0
      %v1840 = vsel %vm744, %v1792, 0
      %v1843 = vsel %vm744, %v1793, 0
      %v1846 = vsel %vm744, %v1794, 0
      %v1849 = vsel %vm744, %v1795, 0
      %v1852 = vsel %vm744, %v1796, 0
      %1854 = vmatprep.subr.mxu0 0.0
      %1855 = vmatpush1.msra.mxu0 0.0
      %1856 = vmatprep.subr.mxu0 0.0
      %1857 = vmatpush1.msra.mxu0 0.0
      %1858 = vmatprep.subr.mxu0 0.0
      %1859 = vmatpush1.msra.mxu0 0.0
      %1860 = vmatprep.subr.mxu0 0.0
      %1861 = vmatpush1.msra.mxu0 0.0
      %1862 = vmatprep.subr.mxu0 0.0
      %1863 = vmatpush1.msra.mxu0 0.0
      %1864 = vmatprep.subr.mxu0 0.0
      %1865 = vmatpush1.msra.mxu0 0.0
      %1866 = vmatprep.subr.mxu0 0.0
      %1867 = vmatpush1.msra.mxu0 0.0
      %1868 = vmatprep.subr.mxu0 0.0
      %1869 = vmatpush1.msra.mxu0 0.0
      %1870 = vmatprep.subr.mxu0 0.0
      %1871 = vmatpush1.msra.mxu0 0.0
      %1872 = vmatprep.subr.mxu0 0.0
      %1873 = vmatpush1.msra.mxu0 0.0
      %1874 = vmatprep.subr.mxu0 0.0
      %1875 = vmatpush1.msra.mxu0 0.0
      %1876 = vmatprep.subr.mxu0 0.0
      %1877 = vmatpush1.msra.mxu0 0.0
      %1878 = vmatprep.subr.mxu0 0.0
      %1879 = vmatpush1.msra.mxu0 0.0
      %1880 = vmatprep.subr.mxu0 0.0
      %1881 = vmatpush1.msra.mxu0 0.0
      %1882 = vmatprep.subr.mxu0 0.0
      %1883 = vmatpush1.msra.mxu0 %v1798
      %1884 = vmatprep.subr.mxu0 0.0
      %1885 = vmatpush1.msra.mxu0 %v1797
      %1886 = vmatprep.subr.mxu0 0.0
      %1887 = vmatpush2.msra.mxu0 0.0
      %1888 = vmatprep.subr.mxu0 0.0
      %1889 = vmatpush2.msra.mxu0 0.0
      %1890 = vmatprep.subr.mxu0 0.0
      %1891 = vmatpush2.msra.mxu0 0.0
      %1892 = vmatprep.subr.mxu0 0.0
      %1893 = vmatpush2.msra.mxu0 0.0
      %1894 = vmatprep.subr.mxu0 0.0
      %1895 = vmatpush2.msra.mxu0 0.0
      %1896 = vmatprep.subr.mxu0 0.0
      %1897 = vmatpush2.msra.mxu0 0.0
      %1898 = vmatprep.subr.mxu0 0.0
      %1899 = vmatpush2.msra.mxu0 0.0
      %1900 = vmatprep.subr.mxu0 0.0
      %1901 = vmatpush2.msra.mxu0 0.0
      %1902 = vmatprep.subr.mxu0 0.0
      %1903 = vmatpush2.msra.mxu0 0.0
      %1904 = vmatprep.subr.mxu0 0.0
      %1905 = vmatpush2.msra.mxu0 0.0
      %1906 = vmatprep.subr.mxu0 0.0
      %1907 = vmatpush2.msra.mxu0 0.0
      %1908 = vmatprep.subr.mxu0 0.0
      %1909 = vmatpush2.msra.mxu0 0.0
      %1910 = vmatprep.subr.mxu0 0.0
      %1911 = vmatpush2.msra.mxu0 0.0
      %1912 = vmatprep.subr.mxu0 0.0
      %1913 = vmatpush2.msra.mxu0 0.0
      %1914 = vmatprep.subr.mxu0 0.0
      %1915 = vmatpush2.msra.mxu0 0.0
      %1916 = vmatprep.subr.mxu0 0.0
      %1917 = vmatpush2.msra.mxu0 0.0
      %1918 = vmatprep.mubr.f32.mxu0 0.0
      %1919 = vmatmul.mubr.f32.gmra.mxu0 %v1807
      %v1920 = vpop.f32.mrf.mxu0
      %v1921 = vadd.f32 %v1804, %v1920
      %v1922 = vpop.f32.mrf.mxu0
      %1923 = vmatprep.mubr.f32.mxu0 0.0
      %1924 = vmatmul.mubr.f32.gmra.mxu0 %v1810
      %v1925 = vpop.f32.mrf.mxu0
      %v1926 = vadd.f32 %v1804, %v1925
      %v1927 = vpop.f32.mrf.mxu0
      %1928 = vmatprep.mubr.f32.mxu0 0.0
      %1929 = vmatmul.mubr.f32.gmra.mxu0 %v1813
      %v1930 = vpop.f32.mrf.mxu0
      %v1931 = vadd.f32 %v1804, %v1930
      %v1932 = vpop.f32.mrf.mxu0
      %1933 = vmatprep.mubr.f32.mxu0 0.0
      %1934 = vmatmul.mubr.f32.gmra.mxu0 %v1816
      %v1935 = vpop.f32.mrf.mxu0
      %v1936 = vadd.f32 %v1804, %v1935
      %v1937 = vpop.f32.mrf.mxu0
      %1938 = vmatprep.mubr.f32.mxu0 0.0
      %1939 = vmatmul.mubr.f32.gmra.mxu0 %v1819
      %v1940 = vpop.f32.mrf.mxu0
      %v1941 = vadd.f32 %v1804, %v1940
      %v1942 = vpop.f32.mrf.mxu0
      %1943 = vmatprep.mubr.f32.mxu0 0.0
      %1944 = vmatmul.mubr.f32.gmra.mxu0 %v1822
      %v1945 = vpop.f32.mrf.mxu0
      %v1946 = vadd.f32 %v1804, %v1945
      %v1947 = vpop.f32.mrf.mxu0
      %1948 = vmatprep.mubr.f32.mxu0 0.0
      %1949 = vmatmul.mubr.f32.gmra.mxu0 %v1825
      %v1950 = vpop.f32.mrf.mxu0
      %v1951 = vadd.f32 %v1804, %v1950
      %v1952 = vpop.f32.mrf.mxu0
      %1953 = vmatprep.mubr.f32.mxu0 0.0
      %1954 = vmatmul.mubr.f32.gmra.mxu0 %v1828
      %v1955 = vpop.f32.mrf.mxu0
      %v1956 = vadd.f32 %v1804, %v1955
      %v1957 = vpop.f32.mrf.mxu0
      %1958 = vmatprep.mubr.f32.mxu0 0.0
      %1959 = vmatmul.mubr.f32.gmra.mxu0 %v1831
      %v1960 = vpop.f32.mrf.mxu0
      %v1961 = vadd.f32 %v1804, %v1960
      %v1962 = vpop.f32.mrf.mxu0
      %1963 = vmatprep.mubr.f32.mxu0 0.0
      %1964 = vmatmul.mubr.f32.gmra.mxu0 %v1834
      %v1965 = vpop.f32.mrf.mxu0
      %v1966 = vadd.f32 %v1804, %v1965
      %v1967 = vpop.f32.mrf.mxu0
      %1968 = vmatprep.mubr.f32.mxu0 0.0
      %1969 = vmatmul.mubr.f32.gmra.mxu0 %v1837
      %v1970 = vpop.f32.mrf.mxu0
      %v1971 = vadd.f32 %v1804, %v1970
      %v1972 = vpop.f32.mrf.mxu0
      %1973 = vmatprep.mubr.f32.mxu0 0.0
      %1974 = vmatmul.mubr.f32.gmra.mxu0 %v1840
      %v1975 = vpop.f32.mrf.mxu0
      %v1976 = vadd.f32 %v1804, %v1975
      %v1977 = vpop.f32.mrf.mxu0
      %1978 = vmatprep.mubr.f32.mxu0 0.0
      %1979 = vmatmul.mubr.f32.gmra.mxu0 %v1843
      %v1980 = vpop.f32.mrf.mxu0
      %v1981 = vadd.f32 %v1804, %v1980
      %v1982 = vpop.f32.mrf.mxu0
      %1983 = vmatprep.mubr.f32.mxu0 0.0
      %1984 = vmatmul.mubr.f32.gmra.mxu0 %v1846
      %v1985 = vpop.f32.mrf.mxu0
      %v1986 = vadd.f32 %v1804, %v1985
      %v1987 = vpop.f32.mrf.mxu0
      %1988 = vmatprep.mubr.f32.mxu0 0.0
      %1989 = vmatmul.mubr.f32.gmra.mxu0 %v1849
      %v1990 = vpop.f32.mrf.mxu0
      %v1991 = vadd.f32 %v1804, %v1990
      %v1992 = vpop.f32.mrf.mxu0
      %1993 = vmatprep.mubr.f32.mxu0 0.0
      %1994 = vmatmul.mubr.f32.gmra.mxu0 %v1852
      %v1995 = vpop.f32.mrf.mxu0
      %v1996 = vadd.f32 %v1804, %v1995
      %v1997 = vpop.f32.mrf.mxu0
      %1998 = vdwg.mxu0
      %v1999 = vadd.f32 %v508, %v1921
      %v2000 = vadd.f32 %v509, %v1926
      %v2001 = vadd.f32 %v510, %v1931
      %v2002 = vadd.f32 %v511, %v1936
      %v2003 = vadd.f32 %v512, %v1941
      %v2004 = vadd.f32 %v513, %v1946
      %v2005 = vadd.f32 %v514, %v1951
      %v2006 = vadd.f32 %v515, %v1956
      %v2007 = vadd.f32 %v516, %v1961
      %v2008 = vadd.f32 %v517, %v1966
      %v2009 = vadd.f32 %v518, %v1971
      %v2010 = vadd.f32 %v519, %v1976
      %v2011 = vadd.f32 %v520, %v1981
      %v2012 = vadd.f32 %v521, %v1986
      %v2013 = vadd.f32 %v522, %v1991
      %v2014 = vadd.f32 %v523, %v1996
      %v2015 = vld [vmem:[%s12] sm:$0x1]
      %v2016 = vld [vmem:[%s13] sm:$0x1]
      %v2017 = vsel %vm548, %v1999, 0.0
      %2018 = vadd.xlane.f32.xlu0 %v2017
      %v2019 = vpop.xlane.xlu0 %2018
      %v2020 = vsel %vm548, %v2000, 0.0
      %2021 = vadd.xlane.f32.xlu0 %v2020
      %v2022 = vpop.xlane.xlu0 %2021
      %v2023 = vsel %vm548, %v2001, 0.0
      %2024 = vadd.xlane.f32.xlu0 %v2023
      %v2025 = vpop.xlane.xlu0 %2024
      %v2026 = vsel %vm548, %v2002, 0.0
      %2027 = vadd.xlane.f32.xlu0 %v2026
      %v2028 = vpop.xlane.xlu0 %2027
      %v2029 = vsel %vm548, %v2003, 0.0
      %2030 = vadd.xlane.f32.xlu0 %v2029
      %v2031 = vpop.xlane.xlu0 %2030
      %v2032 = vsel %vm548, %v2004, 0.0
      %2033 = vadd.xlane.f32.xlu0 %v2032
      %v2034 = vpop.xlane.xlu0 %2033
      %v2035 = vsel %vm548, %v2005, 0.0
      %2036 = vadd.xlane.f32.xlu0 %v2035
      %v2037 = vpop.xlane.xlu0 %2036
      %v2038 = vsel %vm548, %v2006, 0.0
      %2039 = vadd.xlane.f32.xlu0 %v2038
      %v2040 = vpop.xlane.xlu0 %2039
      %v2041 = vsel %vm548, %v2007, 0.0
      %2042 = vadd.xlane.f32.xlu0 %v2041
      %v2043 = vpop.xlane.xlu0 %2042
      %v2044 = vsel %vm548, %v2008, 0.0
      %2045 = vadd.xlane.f32.xlu0 %v2044
      %v2046 = vpop.xlane.xlu0 %2045
      %v2047 = vsel %vm548, %v2009, 0.0
      %2048 = vadd.xlane.f32.xlu0 %v2047
      %v2049 = vpop.xlane.xlu0 %2048
      %v2050 = vsel %vm548, %v2010, 0.0
      %2051 = vadd.xlane.f32.xlu0 %v2050
      %v2052 = vpop.xlane.xlu0 %2051
      %v2053 = vsel %vm548, %v2011, 0.0
      %2054 = vadd.xlane.f32.xlu0 %v2053
      %v2055 = vpop.xlane.xlu0 %2054
      %v2056 = vsel %vm548, %v2012, 0.0
      %2057 = vadd.xlane.f32.xlu0 %v2056
      %v2058 = vpop.xlane.xlu0 %2057
      %v2059 = vsel %vm548, %v2013, 0.0
      %2060 = vadd.xlane.f32.xlu0 %v2059
      %v2061 = vpop.xlane.xlu0 %2060
      %v2062 = vsel %vm548, %v2014, 0.0
      %2063 = vadd.xlane.f32.xlu0 %v2062
      %v2064 = vpop.xlane.xlu0 %2063
      %v2065 = vrcp.pop 8.0
      %v2066 = vmul.f32 %v2019, %v2065
      %v2067 = vmul.f32 %v2022, %v2065
      %v2068 = vmul.f32 %v2025, %v2065
      %v2069 = vmul.f32 %v2028, %v2065
      %v2070 = vmul.f32 %v2031, %v2065
      %v2071 = vmul.f32 %v2034, %v2065
      %v2072 = vmul.f32 %v2037, %v2065
      %v2073 = vmul.f32 %v2040, %v2065
      %v2074 = vmul.f32 %v2043, %v2065
      %v2075 = vmul.f32 %v2046, %v2065
      %v2076 = vmul.f32 %v2049, %v2065
      %v2077 = vmul.f32 %v2052, %v2065
      %v2078 = vmul.f32 %v2055, %v2065
      %v2079 = vmul.f32 %v2058, %v2065
      %v2080 = vmul.f32 %v2061, %v2065
      %v2081 = vmul.f32 %v2064, %v2065
      %v2082 = vsub.f32 %v1999, %v2066
      %v2083 = vsub.f32 %v2000, %v2067
      %v2084 = vsub.f32 %v2001, %v2068
      %v2085 = vsub.f32 %v2002, %v2069
      %v2086 = vsub.f32 %v2003, %v2070
      %v2087 = vsub.f32 %v2004, %v2071
      %v2088 = vsub.f32 %v2005, %v2072
      %v2089 = vsub.f32 %v2006, %v2073
      %v2090 = vsub.f32 %v2007, %v2074
      %v2091 = vsub.f32 %v2008, %v2075
      %v2092 = vsub.f32 %v2009, %v2076
      %v2093 = vsub.f32 %v2010, %v2077
      %v2094 = vsub.f32 %v2011, %v2078
      %v2095 = vsub.f32 %v2012, %v2079
      %v2096 = vsub.f32 %v2013, %v2080
      %v2097 = vsub.f32 %v2014, %v2081
      %v2098 = vmul.f32 %v2082, %v2082
      %v2099 = vmul.f32 %v2083, %v2083
      %v2100 = vmul.f32 %v2084, %v2084
      %v2101 = vmul.f32 %v2085, %v2085
      %v2102 = vmul.f32 %v2086, %v2086
      %v2103 = vmul.f32 %v2087, %v2087
      %v2104 = vmul.f32 %v2088, %v2088
      %v2105 = vmul.f32 %v2089, %v2089
      %v2106 = vmul.f32 %v2090, %v2090
      %v2107 = vmul.f32 %v2091, %v2091
      %v2108 = vmul.f32 %v2092, %v2092
      %v2109 = vmul.f32 %v2093, %v2093
      %v2110 = vmul.f32 %v2094, %v2094
      %v2111 = vmul.f32 %v2095, %v2095
      %v2112 = vmul.f32 %v2096, %v2096
      %v2113 = vmul.f32 %v2097, %v2097
      %v2114 = vsel %vm548, %v2098, 0.0
      %2115 = vadd.xlane.f32.xlu0 %v2114
      %v2116 = vpop.xlane.xlu0 %2115
      %v2117 = vsel %vm548, %v2099, 0.0
      %2118 = vadd.xlane.f32.xlu0 %v2117
      %v2119 = vpop.xlane.xlu0 %2118
      %v2120 = vsel %vm548, %v2100, 0.0
      %2121 = vadd.xlane.f32.xlu0 %v2120
      %v2122 = vpop.xlane.xlu0 %2121
      %v2123 = vsel %vm548, %v2101, 0.0
      %2124 = vadd.xlane.f32.xlu0 %v2123
      %v2125 = vpop.xlane.xlu0 %2124
      %v2126 = vsel %vm548, %v2102, 0.0
      %2127 = vadd.xlane.f32.xlu0 %v2126
      %v2128 = vpop.xlane.xlu0 %2127
      %v2129 = vsel %vm548, %v2103, 0.0
      %2130 = vadd.xlane.f32.xlu0 %v2129
      %v2131 = vpop.xlane.xlu0 %2130
      %v2132 = vsel %vm548, %v2104, 0.0
      %2133 = vadd.xlane.f32.xlu0 %v2132
      %v2134 = vpop.xlane.xlu0 %2133
      %v2135 = vsel %vm548, %v2105, 0.0
      %2136 = vadd.xlane.f32.xlu0 %v2135
      %v2137 = vpop.xlane.xlu0 %2136
      %v2138 = vsel %vm548, %v2106, 0.0
      %2139 = vadd.xlane.f32.xlu0 %v2138
      %v2140 = vpop.xlane.xlu0 %2139
      %v2141 = vsel %vm548, %v2107, 0.0
      %2142 = vadd.xlane.f32.xlu0 %v2141
      %v2143 = vpop.xlane.xlu0 %2142
      %v2144 = vsel %vm548, %v2108, 0.0
      %2145 = vadd.xlane.f32.xlu0 %v2144
      %v2146 = vpop.xlane.xlu0 %2145
      %v2147 = vsel %vm548, %v2109, 0.0
      %2148 = vadd.xlane.f32.xlu0 %v2147
      %v2149 = vpop.xlane.xlu0 %2148
      %v2150 = vsel %vm548, %v2110, 0.0
      %2151 = vadd.xlane.f32.xlu0 %v2150
      %v2152 = vpop.xlane.xlu0 %2151
      %v2153 = vsel %vm548, %v2111, 0.0
      %2154 = vadd.xlane.f32.xlu0 %v2153
      %v2155 = vpop.xlane.xlu0 %2154
      %v2156 = vsel %vm548, %v2112, 0.0
      %2157 = vadd.xlane.f32.xlu0 %v2156
      %v2158 = vpop.xlane.xlu0 %2157
      %v2159 = vsel %vm548, %v2113, 0.0
      %2160 = vadd.xlane.f32.xlu0 %v2159
      %v2161 = vpop.xlane.xlu0 %2160
      %v2162 = vmul.f32 %v2116, %v2065
      %v2163 = vmul.f32 %v2119, %v2065
      %v2164 = vmul.f32 %v2122, %v2065
      %v2165 = vmul.f32 %v2125, %v2065
      %v2166 = vmul.f32 %v2128, %v2065
      %v2167 = vmul.f32 %v2131, %v2065
      %v2168 = vmul.f32 %v2134, %v2065
      %v2169 = vmul.f32 %v2137, %v2065
      %v2170 = vmul.f32 %v2140, %v2065
      %v2171 = vmul.f32 %v2143, %v2065
      %v2172 = vmul.f32 %v2146, %v2065
      %v2173 = vmul.f32 %v2149, %v2065
      %v2174 = vmul.f32 %v2152, %v2065
      %v2175 = vmul.f32 %v2155, %v2065
      %v2176 = vmul.f32 %v2158, %v2065
      %v2177 = vmul.f32 %v2161, %v2065
      %v2178 = vadd.f32 %v2162, 1e-05
      %v2179 = vadd.f32 %v2163, 1e-05
      %v2180 = vadd.f32 %v2164, 1e-05
      %v2181 = vadd.f32 %v2165, 1e-05
      %v2182 = vadd.f32 %v2166, 1e-05
      %v2183 = vadd.f32 %v2167, 1e-05
      %v2184 = vadd.f32 %v2168, 1e-05
      %v2185 = vadd.f32 %v2169, 1e-05
      %v2186 = vadd.f32 %v2170, 1e-05
      %v2187 = vadd.f32 %v2171, 1e-05
      %v2188 = vadd.f32 %v2172, 1e-05
      %v2189 = vadd.f32 %v2173, 1e-05
      %v2190 = vadd.f32 %v2174, 1e-05
      %v2191 = vadd.f32 %v2175, 1e-05
      %v2192 = vadd.f32 %v2176, 1e-05
      %v2193 = vadd.f32 %v2177, 1e-05
      %v2194 = vrsqrt.pop %v2178
      %v2195 = vrsqrt.pop %v2179
      %v2196 = vrsqrt.pop %v2180
      %v2197 = vrsqrt.pop %v2181
      %v2198 = vrsqrt.pop %v2182
      %v2199 = vrsqrt.pop %v2183
      %v2200 = vrsqrt.pop %v2184
      %v2201 = vrsqrt.pop %v2185
      %v2202 = vrsqrt.pop %v2186
      %v2203 = vrsqrt.pop %v2187
      %v2204 = vrsqrt.pop %v2188
      %v2205 = vrsqrt.pop %v2189
      %v2206 = vrsqrt.pop %v2190
      %v2207 = vrsqrt.pop %v2191
      %v2208 = vrsqrt.pop %v2192
      %v2209 = vrsqrt.pop %v2193
      %v2210 = vmul.f32 %v2082, %v2194
      %v2211 = vmul.f32 %v2083, %v2195
      %v2212 = vmul.f32 %v2084, %v2196
      %v2213 = vmul.f32 %v2085, %v2197
      %v2214 = vmul.f32 %v2086, %v2198
      %v2215 = vmul.f32 %v2087, %v2199
      %v2216 = vmul.f32 %v2088, %v2200
      %v2217 = vmul.f32 %v2089, %v2201
      %v2218 = vmul.f32 %v2090, %v2202
      %v2219 = vmul.f32 %v2091, %v2203
      %v2220 = vmul.f32 %v2092, %v2204
      %v2221 = vmul.f32 %v2093, %v2205
      %v2222 = vmul.f32 %v2094, %v2206
      %v2223 = vmul.f32 %v2095, %v2207
      %v2224 = vmul.f32 %v2096, %v2208
      %v2225 = vmul.f32 %v2097, %v2209
      %v2227 = vlaneseq
      %v2228 = vshrl.u32 %v2227, 7
      %v2229 = vsub.s32 0, %v2228
      %v2230 = vrot.slane %v2015, %v2229
      %v2232 = vmul.f32 %v2210, %v2230
      %v2233 = vmul.f32 %v2211, %v2230
      %v2234 = vmul.f32 %v2212, %v2230
      %v2235 = vmul.f32 %v2213, %v2230
      %v2236 = vmul.f32 %v2214, %v2230
      %v2237 = vmul.f32 %v2215, %v2230
      %v2238 = vmul.f32 %v2216, %v2230
      %v2239 = vmul.f32 %v2217, %v2230
      %v2240 = vmul.f32 %v2218, %v2230
      %v2241 = vmul.f32 %v2219, %v2230
      %v2242 = vmul.f32 %v2220, %v2230
      %v2243 = vmul.f32 %v2221, %v2230
      %v2244 = vmul.f32 %v2222, %v2230
      %v2245 = vmul.f32 %v2223, %v2230
      %v2246 = vmul.f32 %v2224, %v2230
      %v2247 = vmul.f32 %v2225, %v2230
      %v2249 = vlaneseq
      %v2250 = vshrl.u32 %v2249, 7
      %v2251 = vsub.s32 0, %v2250
      %v2252 = vrot.slane %v2016, %v2251
      %v2254 = vadd.f32 %v2232, %v2252
      %v2255 = vadd.f32 %v2233, %v2252
      %v2256 = vadd.f32 %v2234, %v2252
      %v2257 = vadd.f32 %v2235, %v2252
      %v2258 = vadd.f32 %v2236, %v2252
      %v2259 = vadd.f32 %v2237, %v2252
      %v2260 = vadd.f32 %v2238, %v2252
      %v2261 = vadd.f32 %v2239, %v2252
      %v2262 = vadd.f32 %v2240, %v2252
      %v2263 = vadd.f32 %v2241, %v2252
      %v2264 = vadd.f32 %v2242, %v2252
      %v2265 = vadd.f32 %v2243, %v2252
      %v2266 = vadd.f32 %v2244, %v2252
      %v2267 = vadd.f32 %v2245, %v2252
      %v2268 = vadd.f32 %v2246, %v2252
      %v2269 = vadd.f32 %v2247, %v2252
      %2270 = vst.msk [vmem:[%s506] sm:$0xff] %vm548, %v2254
      %2271 = vst.msk [vmem:[%s506 + $0x8] sm:$0xff] %vm548, %v2255
      %2272 = vst.msk [vmem:[%s506 + $0x10] sm:$0xff] %vm548, %v2256
      %2273 = vst.msk [vmem:[%s506 + $0x18] sm:$0xff] %vm548, %v2257
      %2274 = vst.msk [vmem:[%s506 + $0x20] sm:$0xff] %vm548, %v2258
      %2275 = vst.msk [vmem:[%s506 + $0x28] sm:$0xff] %vm548, %v2259
      %2276 = vst.msk [vmem:[%s506 + $0x30] sm:$0xff] %vm548, %v2260
      %2277 = vst.msk [vmem:[%s506 + $0x38] sm:$0xff] %vm548, %v2261
      %2278 = vst.msk [vmem:[%s506 + $0x40] sm:$0xff] %vm548, %v2262
      %2279 = vst.msk [vmem:[%s506 + $0x48] sm:$0xff] %vm548, %v2263
      %2280 = vst.msk [vmem:[%s506 + $0x50] sm:$0xff] %vm548, %v2264
      %2281 = vst.msk [vmem:[%s506 + $0x58] sm:$0xff] %vm548, %v2265
      %2282 = vst.msk [vmem:[%s506 + $0x60] sm:$0xff] %vm548, %v2266
      %2283 = vst.msk [vmem:[%s506 + $0x68] sm:$0xff] %vm548, %v2267
      %2284 = vst.msk [vmem:[%s506 + $0x70] sm:$0xff] %vm548, %v2268
      %2285 = vst.msk [vmem:[%s506 + $0x78] sm:$0xff] %vm548, %v2269
      %s2286 = smul.u32 16, %s31
      %p2287 = scmp.lt.s32.totalorder %s30, 1
      %s2288 = scalar_select %p2287, %s30, 1
      %p2289 = scmp.lt.s32.totalorder %s2286, 63
      %s2290 = scalar_select %p2289, %s2286, 63
      %s2291 = smul.addr %s2288, 64
      %s2292 = sadd.s32 %s2290, %s2291
      %s2293 = smul.addr %s2292, 8
      %s2294 = scalar_lea.vmem %s14, %s2293
      // Predicated region
      $region81: #{tpu_custom_call.1} parent=75 // pred_check
        %p2295 = pneg %p359
      $region82: #{tpu_custom_call.1} parent=75 // pred_check_branch
        %2297 = sbr.rel (%p2295) target = $region84
      $region83: #{tpu_custom_call.1} parent=75 // pred_region
        %s2298 = smul.u32 16, %s31
      $region84: #{tpu_custom_call.1} parent=75 // pred_fallthru
        _
    $region76: #{tpu_custom_call.1} parent=5 // pred_fallthru
      _
    %p2299 = scmp.le.s32.totalorder 2, %s21
    // Predicated region
    $region85: #{tpu_custom_call.1} parent=5 // pred_check
      %p2300 = pneg %p2299
    $region86: #{tpu_custom_call.1} parent=5 // pred_check_branch
      %2302 = sbr.rel (%p2300) target = $region88
    $region87: #{tpu_custom_call.1} parent=5 // pred_region
      %s2303 = ssub.s32 %s21, 2
      // Predicated region
      $region89: #{tpu_custom_call.1} parent=87 // pred_check
        %p2304 = pneg %p365
      $region90: #{tpu_custom_call.1} parent=87 // pred_check_branch
        %2306 = sbr.rel (%p2304) target = $region92
      $region91: #{tpu_custom_call.1} parent=87 // pred_region
        %s2307 = smul.u32 16, %s33
        %p2308 = scmp.lt.s32.totalorder %s32, 1
        %s2309 = scalar_select %p2308, %s32, 1
        %p2310 = scmp.lt.s32.totalorder %s2307, 63
        %s2311 = scalar_select %p2310, %s2307, 63
        %s2312 = smul.addr %s2309, 64
        %s2313 = sadd.s32 %s2311, %s2312
        %s2314 = smul.addr %s2313, 8
        %s2315 = scalar_lea.vmem %s14, %s2314
      $region92: #{tpu_custom_call.1} parent=87 // pred_fallthru
        _
    $region88: #{tpu_custom_call.1} parent=5 // pred_fallthru
      _
  $region6: #{tpu_custom_call.1} parent=0 // loop_footer
    %s25 = sadd.s32 1, %s21
  $region7: #{tpu_custom_call.1} parent=0 // loop_footer_branch
    %20 = sbr.rel target = $region3
  $region8: #{tpu_custom_call.1} parent=0 // loop_exit
    _

</llo_original>
